<compile_context>
chip_gen: v7x
topology: tpu7x:2x2x1
jax: 0.10.0
libtpu: 0.0.40
codegen_flags: <defaults>
</compile_context>

<pallas_src>
from functools import partial

import numpy as np

import jax
import jax.numpy as jnp
from jax.experimental import pallas as pl
from jax.experimental.pallas import tpu as pltpu


def _round_up(v, m):
    return ((v + m - 1) // m) * m


def _avg_weight(L, kernel_size, Lp):
    """(Lp, Lp) banded averaging matrix; replicate padding folded in, zero-padded."""
    pad = (kernel_size - 1) // 2
    idx = np.arange(L)
    # src[i, d]: clamped input index feeding output position i at tap d.
    src = np.clip(idx[:, None] + np.arange(-pad, pad + 1)[None, :], 0, L - 1)
    W = np.zeros((Lp, Lp), dtype=np.float32)
    np.add.at(W, (src.ravel(), np.repeat(idx, kernel_size)), 1.0 / kernel_size)
    return W


def _decomp_kernel(x_ref, w_ref, res_ref, mean_ref, *, precision):
    x = x_ref[...]
    # Moving average on the MXU: (rows, Lp) @ (Lp, Lp) with f32 accumulation.
    mean_f32 = jnp.dot(x, w_ref[...],
                       preferred_element_type=jnp.float32,
                       precision=precision)
    mean_ref[...] = mean_f32.astype(mean_ref.dtype)
    # Subtract in f32, cast once (matches the f32 reference rounding).
    res_ref[...] = (x.astype(jnp.float32) - mean_f32).astype(res_ref.dtype)


def _make_call(kernel, R, Lp, rb, dtype, itemsize, single_buffer_w):
    w_kwargs = {"pipeline_mode": pl.Buffered(1)} if single_buffer_w else {}
    grid = (pl.cdiv(R, rb),)
    return pl.pallas_call(
        kernel,
        out_shape=(
            jax.ShapeDtypeStruct((R, Lp), dtype),
            jax.ShapeDtypeStruct((R, Lp), dtype),
        ),
        grid_spec=pltpu.PrefetchScalarGridSpec(
            num_scalar_prefetch=0,
            grid=grid,
            in_specs=[
                pl.BlockSpec((rb, Lp), lambda i: (i, 0)),
                # W is identical every step: resident across the grid.
                pl.BlockSpec((Lp, Lp), lambda i: (0, 0), **w_kwargs),
            ],
            out_specs=[
                pl.BlockSpec((rb, Lp), lambda i: (i, 0)),
                pl.BlockSpec((rb, Lp), lambda i: (i, 0)),
            ],
        ),
        compiler_params=pltpu.CompilerParams(
            dimension_semantics=("parallel",),
            vmem_limit_bytes=32 * 1024 * 1024,
        ),
        cost_estimate=pl.CostEstimate(
            flops=2 * R * Lp * Lp,
            transcendentals=0,
            bytes_accessed=(3 * R * Lp + Lp * Lp) * itemsize,
        ),
    )


def series_decomp(x, kernel_size, *, row_block=1024,
                  vmem_budget_bytes=20 * 1024 * 1024):
    """x: (B, C, L) float array.  Returns (res, moving_mean), both (B, C, L)."""
    assert kernel_size % 2 == 1, "odd kernel_size keeps output length == L"
    B, C, L = x.shape
    R = B * C
    dtype = x.dtype
    itemsize = jnp.dtype(dtype).itemsize

    # Lane-dense sequence axis: pad to a multiple of 128 (zero rows/cols in W
    # make the padded region inert); slice the outputs back afterwards.
    Lp = _round_up(L, 128)
    W = jnp.asarray(_avg_weight(L, kernel_size, Lp), dtype=dtype)

    x2 = x.reshape(R, L)
    if Lp != L:
        x2 = jnp.pad(x2, ((0, 0), (0, Lp - L)))

    # Row-block sizing: VMEM-budgeted (x/res/mean double-buffered + 2x W,
    # conservative), capped at `row_block`, clamped so there are >= 2 row
    # blocks when R allows (v7x runs one grid block per TensorCore), and
    # rounded to the sublane granule.
    gran = 8 if itemsize >= 4 else 16
    w_bytes = 2 * Lp * Lp * itemsize            # conservative: 2 W buffers
    per_row_bytes = 3 * 2 * Lp * itemsize       # (x, res, mean) x double buffer
    rb = max(gran, (vmem_budget_bytes - w_bytes) // per_row_bytes)
    rb = min(rb, row_block)
    rb = min(rb, _round_up(max(R // 2, 1), gran))   # >= 2 blocks for megacore
    rb = min(rb, _round_up(R, gran))
    rb = max(gran, (rb // gran) * gran)

    # f32 path: force multi-pass f32 matmul (default MXU precision truncates
    # operands to bf16, ~1e-3 relative error).  Free — the kernel is HBM-bound.
    precision = jax.lax.Precision.HIGHEST if dtype == jnp.float32 else None
    kernel = partial(_decomp_kernel, precision=precision)

    try:
        call = _make_call(kernel, R, Lp, rb, dtype, itemsize, single_buffer_w=True)
        res, mean = call(x2, W)
    except Exception:
        # pipeline_mode=pl.Buffered(1) not supported by this build; fall back
        # to the default 2-deep pipeline for W (identical semantics).
        call = _make_call(kernel, R, Lp, rb, dtype, itemsize, single_buffer_w=False)
        res, mean = call(x2, W)

    if Lp != L:
        res, mean = res[:, :L], mean[:, :L]
    return res.reshape(B, C, L), mean.reshape(B, C, L)


def _reference(x, kernel_size):
    """Pure-JAX reference mirroring the PyTorch forward."""
    pad = (kernel_size - 1) // 2
    front = jnp.repeat(x[:, :, :1], pad, axis=2)
    end = jnp.repeat(x[:, :, -1:], pad, axis=2)
    xp = jnp.concatenate([front, x, end], axis=2)
    L = x.shape[-1]
    mean = jnp.stack([xp[:, :, j:j + L] for j in range(kernel_size)], 0).mean(0)
    return x - mean, mean


if __name__ == "__main__":
    key = jax.random.PRNGKey(0)

    # PatchMLP-style decomposition: (batch, channels, sequence length).
    B, C, L = 2, 4, 128
    kernel_size = 25
    x = jax.random.normal(key, (B, C, L), dtype=jnp.float32)

    res, mean = series_decomp(x, kernel_size)
    jax.block_until_ready((res, mean))

    res_ref, mean_ref = _reference(x, kernel_size)
    assert jnp.allclose(res, res_ref, atol=1e-5, rtol=1e-5)
    assert jnp.allclose(mean, mean_ref, atol=1e-5, rtol=1e-5)

    # Non-multiple-of-128 sequence length exercises the lane-padding path.
    L2, k2 = 96, 13
    x_odd = jax.random.normal(jax.random.PRNGKey(1), (B, C, L2), dtype=jnp.float32)
    res2, mean2 = series_decomp(x_odd, k2)
    jax.block_until_ready((res2, mean2))
    res2_ref, mean2_ref = _reference(x_odd, k2)
    assert jnp.allclose(res2, res2_ref, atol=1e-5, rtol=1e-5)
    assert jnp.allclose(mean2, mean2_ref, atol=1e-5, rtol=1e-5)

    print("KERNEL_OK")
</pallas_src>

<mosaic_0001>
module attributes {stable_mosaic.version = 11 : i64} {
  func.func @_decomp_kernel(%arg0: i32, %arg1: memref<8x128xf32, #tpu.memory_space<vmem>>, %arg2: memref<128x128xf32, #tpu.memory_space<vmem>>, %arg3: memref<8x128xf32, #tpu.memory_space<vmem>>, %arg4: memref<8x128xf32, #tpu.memory_space<vmem>>) attributes {dimension_semantics = [#tpu.dimension_semantics<parallel>], iteration_bounds = array<i64: 1>, scalar_prefetch = 0 : i64, scratch_operands = 0 : i64, tpu.core_type = #tpu.core_type<tc>, window_params = [{transform_indices = @transform_0, window_bounds = array<i64: 8, 128>}, {pipeline_mode = #tpu.pipeline_mode<synchronous>, transform_indices = @transform_1, window_bounds = array<i64: 128, 128>}, {transform_indices = @transform_2, window_bounds = array<i64: 8, 128>}, {transform_indices = @transform_3, window_bounds = array<i64: 8, 128>}]} {
    %c0 = arith.constant 0 : index
    %c0_0 = arith.constant 0 : index
    %0 = vector.load %arg1[%c0, %c0_0] : memref<8x128xf32, #tpu.memory_space<vmem>>, vector<8x128xf32>
    %c0_1 = arith.constant 0 : index
    %c0_2 = arith.constant 0 : index
    %1 = vector.load %arg2[%c0_1, %c0_2] : memref<128x128xf32, #tpu.memory_space<vmem>>, vector<128x128xf32>
    %cst = arith.constant dense<0.000000e+00> : vector<8x128xf32>
    %2 = tpu.matmul %0, %1, %cst {dimension_numbers = #tpu.dot_dimension_numbers<[1], [0], [0], [1], [0, 0, 1, 1], [], []>, precision = #tpu.contract_precision<fp32>} : vector<8x128xf32>, vector<128x128xf32>, vector<8x128xf32> -> vector<8x128xf32>
    %c0_3 = arith.constant 0 : index
    %c0_4 = arith.constant 0 : index
    %3 = vector.load %arg4[%c0_3, %c0_4] : memref<8x128xf32, #tpu.memory_space<vmem>>, vector<8x128xf32>
    tpu.vector_store %arg4[%c0_3, %c0_4], %2 {strides = array<i32>} : memref<8x128xf32, #tpu.memory_space<vmem>>, vector<8x128xf32>,
    %4 = arith.subf %0, %2 : vector<8x128xf32>
    %c0_5 = arith.constant 0 : index
    %c0_6 = arith.constant 0 : index
    %5 = vector.load %arg3[%c0_5, %c0_6] : memref<8x128xf32, #tpu.memory_space<vmem>>, vector<8x128xf32>
    tpu.vector_store %arg3[%c0_5, %c0_6], %4 {strides = array<i32>} : memref<8x128xf32, #tpu.memory_space<vmem>>, vector<8x128xf32>,
    return
  }
  func.func @transform_0(%arg0: i32) -> (i32, i32) {
    %c0_i32 = arith.constant 0 : i32
    %c0_i32_0 = arith.constant 0 : i32
    return %arg0, %c0_i32 : i32, i32
  }
  func.func @transform_1(%arg0: i32) -> (i32, i32) {
    %c0_i32 = arith.constant 0 : i32
    %c0_i32_0 = arith.constant 0 : i32
    %c0_i32_1 = arith.constant 0 : i32
    return %c0_i32, %c0_i32_0 : i32, i32
  }
  func.func @transform_2(%arg0: i32) -> (i32, i32) {
    %c0_i32 = arith.constant 0 : i32
    %c0_i32_0 = arith.constant 0 : i32
    return %arg0, %c0_i32 : i32, i32
  }
  func.func @transform_3(%arg0: i32) -> (i32, i32) {
    %c0_i32 = arith.constant 0 : i32
    %c0_i32_0 = arith.constant 0 : i32
    return %arg0, %c0_i32 : i32, i32
  }
}

module attributes {stable_mosaic.version = 11 : i64} {
  func.func @_decomp_kernel(%arg0: i32, %arg1: memref<8x128xf32, #tpu.memory_space<vmem>>, %arg2: memref<128x128xf32, #tpu.memory_space<vmem>>, %arg3: memref<8x128xf32, #tpu.memory_space<vmem>>, %arg4: memref<8x128xf32, #tpu.memory_space<vmem>>) attributes {dimension_semantics = [#tpu.dimension_semantics<parallel>], iteration_bounds = array<i64: 1>, scalar_prefetch = 0 : i64, scratch_operands = 0 : i64, tpu.core_type = #tpu.core_type<tc>, window_params = [{transform_indices = @transform_0, window_bounds = array<i64: 8, 128>}, {pipeline_mode = #tpu.pipeline_mode<synchronous>, transform_indices = @transform_1, window_bounds = array<i64: 128, 128>}, {transform_indices = @transform_2, window_bounds = array<i64: 8, 128>}, {transform_indices = @transform_3, window_bounds = array<i64: 8, 128>}]} {
    %c0 = arith.constant 0 : index
    %c0_0 = arith.constant 0 : index
    %0 = vector.load %arg1[%c0, %c0_0] : memref<8x128xf32, #tpu.memory_space<vmem>>, vector<8x128xf32>
    %c0_1 = arith.constant 0 : index
    %c0_2 = arith.constant 0 : index
    %1 = vector.load %arg2[%c0_1, %c0_2] : memref<128x128xf32, #tpu.memory_space<vmem>>, vector<128x128xf32>
    %cst = arith.constant dense<0.000000e+00> : vector<8x128xf32>
    %2 = tpu.matmul %0, %1, %cst {dimension_numbers = #tpu.dot_dimension_numbers<[1], [0], [0], [1], [0, 0, 1, 1], [], []>, precision = #tpu.contract_precision<fp32>} : vector<8x128xf32>, vector<128x128xf32>, vector<8x128xf32> -> vector<8x128xf32>
    %c0_3 = arith.constant 0 : index
    %c0_4 = arith.constant 0 : index
    %3 = vector.load %arg4[%c0_3, %c0_4] : memref<8x128xf32, #tpu.memory_space<vmem>>, vector<8x128xf32>
    tpu.vector_store %arg4[%c0_3, %c0_4], %2 {strides = array<i32>} : memref<8x128xf32, #tpu.memory_space<vmem>>, vector<8x128xf32>,
    %4 = arith.subf %0, %2 : vector<8x128xf32>
    %c0_5 = arith.constant 0 : index
    %c0_6 = arith.constant 0 : index
    %5 = vector.load %arg3[%c0_5, %c0_6] : memref<8x128xf32, #tpu.memory_space<vmem>>, vector<8x128xf32>
    tpu.vector_store %arg3[%c0_5, %c0_6], %4 {strides = array<i32>} : memref<8x128xf32, #tpu.memory_space<vmem>>, vector<8x128xf32>,
    return
  }
  func.func @transform_0(%arg0: i32) -> (i32, i32) {
    %c0_i32 = arith.constant 0 : i32
    %c0_i32_0 = arith.constant 0 : i32
    return %arg0, %c0_i32 : i32, i32
  }
  func.func @transform_1(%arg0: i32) -> (i32, i32) {
    %c0_i32 = arith.constant 0 : i32
    %c0_i32_0 = arith.constant 0 : i32
    %c0_i32_1 = arith.constant 0 : i32
    return %c0_i32, %c0_i32_0 : i32, i32
  }
  func.func @transform_2(%arg0: i32) -> (i32, i32) {
    %c0_i32 = arith.constant 0 : i32
    %c0_i32_0 = arith.constant 0 : i32
    return %arg0, %c0_i32 : i32, i32
  }
  func.func @transform_3(%arg0: i32) -> (i32, i32) {
    %c0_i32 = arith.constant 0 : i32
    %c0_i32_0 = arith.constant 0 : i32
    return %arg0, %c0_i32 : i32, i32
  }
}

</mosaic_0001>

<llo_original>
// kernel: tpu_custom_call.1
$region0: #{tpu_custom_call.1}
  #allocation0 [shape = 'u32[]', space=smem, size = 0x4, offset = 0x4, fixed_abs, tag = 'smem constant byte address 0x4 - core index']
  #allocation1 [shape = 'u32[144,128]{1,0:T(1,128)}', space=vmem, size = 0x12000, scoped, tag = 'internal scratch']
  %s0 = inlined_call_operand.hbm [shape: f32[8,128], index: 0, kind: input, shape index: {}]
  %s1 = inlined_call_operand.hbm [shape: f32[128,128], index: 1, kind: input, shape index: {}]
  %s2 = inlined_call_operand.hbm [shape: f32[8,128], index: 2, kind: output, shape index: {0}]
  %s3 = inlined_call_operand.hbm [shape: f32[8,128], index: 3, kind: output, shape index: {1}]
  %4 = xla_tuple %s2, %s3
  %s5 = sld [smem:[#allocation0]]
  $region34: #{tpu_custom_call.1} parent=0
    _
  %s7 = ssub.s32 1, %s5
  %s8 = scalar_select 0, %s7, %s5
  $region1: #{tpu_custom_call.1} parent=0
    #allocation2 [shape = 'u8[4096]{0}', space=vmem, size = 0x1000, scoped, tag = 'input window, operand 0, single buffered']
    #allocation3 [shape = 's32[1]{0}', space=sflag, size = 0x4, scoped, tag = 'scoped memory for tpu_custom_call.1']
    #allocation4 [shape = 's32[1]{0}', space=sflag, size = 0x4, scoped, tag = 'scoped memory for tpu_custom_call.1']
    #allocation5 [shape = 'u8[65536]{0}', space=vmem, size = 0x10000, scoped, tag = 'input window, operand 1, single buffered']
    #allocation6 [shape = 's32[1]{0}', space=sflag, size = 0x4, scoped, tag = 'scoped memory for tpu_custom_call.1']
    #allocation7 [shape = 'u8[4096]{0}', space=vmem, size = 0x1000, scoped, tag = 'output window, operand 0, single buffered']
    #allocation8 [shape = 'u8[4096]{0}', space=vmem, size = 0x1000, scoped, tag = 'output window, operand 1, single buffered']
    #allocation9 [shape = 's32[1]{0}', space=sflag, size = 0x4, scoped, tag = 'scoped memory for tpu_custom_call.1']
    %9 = vsyncpa [#allocation3], 0
    %10 = vsyncpa [#allocation6], 0
    %11 = vsyncpa [#allocation4], 0
    %12 = vsyncpa [#allocation9], 0
    // Predicated region
    $region2: #{tpu_custom_call.1} parent=1 // pred_check
      _
    $region3: #{tpu_custom_call.1} parent=1 // pred_check_branch
      %14 = sbr.rel (0) target = $region5
    $region4: #{tpu_custom_call.1} parent=1 // pred_region
      %s16 = ssub.s32 128, 128
      %17 = vsyncadd [#allocation3], %s16
      %s19 = sshll.u32 [#allocation2], 4
      %s20 = int_to_ptr.vmem [resolvable:$true] %s19
      %22 = dma.hbm_to_vmem [thread:$0]  %s0, 128, %s20, [#allocation3]
    $region5: #{tpu_custom_call.1} parent=1 // pred_fallthru
      _
    // Predicated region
    $region6: #{tpu_custom_call.1} parent=1 // pred_check
      _
    $region7: #{tpu_custom_call.1} parent=1 // pred_check_branch
      %24 = sbr.rel (0) target = $region9
    $region8: #{tpu_custom_call.1} parent=1 // pred_region
      %s26 = ssub.s32 2048, 2048
      %27 = vsyncadd [#allocation6], %s26
      %s28 = sshll.u32 [#allocation5], 4
      %s29 = int_to_ptr.vmem [resolvable:$true] %s28
      %34 = dma.hbm_to_vmem [thread:$0]  %s1, 2048, %s29, [#allocation6], 128, 128, 8
    $region9: #{tpu_custom_call.1} parent=1 // pred_fallthru
      _
    // Predicated region
    $region10: #{tpu_custom_call.1} parent=1 // pred_check
      _
    $region11: #{tpu_custom_call.1} parent=1 // pred_check_branch
      %36 = sbr.rel (0) target = $region13
    $region12: #{tpu_custom_call.1} parent=1 // pred_region
      %37 = dma.done [#allocation3], 128
    $region13: #{tpu_custom_call.1} parent=1 // pred_fallthru
      _
    // Predicated region
    $region14: #{tpu_custom_call.1} parent=1 // pred_check
      _
    $region15: #{tpu_custom_call.1} parent=1 // pred_check_branch
      %39 = sbr.rel (0) target = $region17
    $region16: #{tpu_custom_call.1} parent=1 // pred_region
      %40 = dma.done [#allocation6], 2048
    $region17: #{tpu_custom_call.1} parent=1 // pred_fallthru
      _
    %v41 = vld [vmem:[#allocation2] sm:$0xff]
    %v42 = vld [vmem:[#allocation5] sm:$0xff]
    %v43 = vld [vmem:[#allocation5 + $0x8] sm:$0xff]
    %v44 = vld [vmem:[#allocation5 + $0x10] sm:$0xff]
    %v45 = vld [vmem:[#allocation5 + $0x18] sm:$0xff]
    %v46 = vld [vmem:[#allocation5 + $0x20] sm:$0xff]
    %v47 = vld [vmem:[#allocation5 + $0x28] sm:$0xff]
    %v48 = vld [vmem:[#allocation5 + $0x30] sm:$0xff]
    %v49 = vld [vmem:[#allocation5 + $0x38] sm:$0xff]
    %v50 = vld [vmem:[#allocation5 + $0x40] sm:$0xff]
    %v51 = vld [vmem:[#allocation5 + $0x48] sm:$0xff]
    %v52 = vld [vmem:[#allocation5 + $0x50] sm:$0xff]
    %v53 = vld [vmem:[#allocation5 + $0x58] sm:$0xff]
    %v54 = vld [vmem:[#allocation5 + $0x60] sm:$0xff]
    %v55 = vld [vmem:[#allocation5 + $0x68] sm:$0xff]
    %v56 = vld [vmem:[#allocation5 + $0x70] sm:$0xff]
    %v57 = vld [vmem:[#allocation5 + $0x78] sm:$0xff]
    %58 = vmatprep.subr.mxu0 0.0
    %v59 = vand.u32 %v42, 4294901760
    %60 = vmatpush1.msra.mxu0 %v59
    %61 = vmatprep.subr.mxu0 0.0
    %v62 = vand.u32 %v43, 4294901760
    %63 = vmatpush1.msra.mxu0 %v62
    %64 = vmatprep.subr.mxu0 0.0
    %v65 = vand.u32 %v44, 4294901760
    %66 = vmatpush1.msra.mxu0 %v65
    %67 = vmatprep.subr.mxu0 0.0
    %v68 = vand.u32 %v45, 4294901760
    %69 = vmatpush1.msra.mxu0 %v68
    %70 = vmatprep.subr.mxu0 0.0
    %v71 = vand.u32 %v46, 4294901760
    %72 = vmatpush1.msra.mxu0 %v71
    %73 = vmatprep.subr.mxu0 0.0
    %v74 = vand.u32 %v47, 4294901760
    %75 = vmatpush1.msra.mxu0 %v74
    %76 = vmatprep.subr.mxu0 0.0
    %v77 = vand.u32 %v48, 4294901760
    %78 = vmatpush1.msra.mxu0 %v77
    %79 = vmatprep.subr.mxu0 0.0
    %v80 = vand.u32 %v49, 4294901760
    %81 = vmatpush1.msra.mxu0 %v80
    %82 = vmatprep.subr.mxu0 0.0
    %v83 = vand.u32 %v50, 4294901760
    %84 = vmatpush1.msra.mxu0 %v83
    %85 = vmatprep.subr.mxu0 0.0
    %v86 = vand.u32 %v51, 4294901760
    %87 = vmatpush1.msra.mxu0 %v86
    %88 = vmatprep.subr.mxu0 0.0
    %v89 = vand.u32 %v52, 4294901760
    %90 = vmatpush1.msra.mxu0 %v89
    %91 = vmatprep.subr.mxu0 0.0
    %v92 = vand.u32 %v53, 4294901760
    %93 = vmatpush1.msra.mxu0 %v92
    %94 = vmatprep.subr.mxu0 0.0
    %v95 = vand.u32 %v54, 4294901760
    %96 = vmatpush1.msra.mxu0 %v95
    %97 = vmatprep.subr.mxu0 0.0
    %v98 = vand.u32 %v55, 4294901760
    %99 = vmatpush1.msra.mxu0 %v98
    %100 = vmatprep.subr.mxu0 0.0
    %v101 = vand.u32 %v56, 4294901760
    %102 = vmatpush1.msra.mxu0 %v101
    %103 = vmatprep.subr.mxu0 0.0
    %v104 = vand.u32 %v57, 4294901760
    %105 = vmatpush1.msra.mxu0 %v104
    %106 = vmatprep.subr.mxu0 0.0
    %107 = vmatpush1.msra.mxu0 0.0
    %108 = vmatprep.subr.mxu0 0.0
    %109 = vmatpush1.msra.mxu0 0.0
    %110 = vmatprep.subr.mxu0 0.0
    %111 = vmatpush1.msra.mxu0 0.0
    %112 = vmatprep.subr.mxu0 0.0
    %113 = vmatpush1.msra.mxu0 0.0
    %114 = vmatprep.subr.mxu0 0.0
    %115 = vmatpush1.msra.mxu0 0.0
    %116 = vmatprep.subr.mxu0 0.0
    %117 = vmatpush1.msra.mxu0 0.0
    %118 = vmatprep.subr.mxu0 0.0
    %119 = vmatpush1.msra.mxu0 0.0
    %120 = vmatprep.subr.mxu0 0.0
    %121 = vmatpush1.msra.mxu0 0.0
    %122 = vmatprep.subr.mxu0 0.0
    %123 = vmatpush1.msra.mxu0 0.0
    %124 = vmatprep.subr.mxu0 0.0
    %125 = vmatpush1.msra.mxu0 0.0
    %126 = vmatprep.subr.mxu0 0.0
    %127 = vmatpush1.msra.mxu0 0.0
    %128 = vmatprep.subr.mxu0 0.0
    %129 = vmatpush1.msra.mxu0 0.0
    %130 = vmatprep.subr.mxu0 0.0
    %131 = vmatpush1.msra.mxu0 0.0
    %132 = vmatprep.subr.mxu0 0.0
    %133 = vmatpush1.msra.mxu0 0.0
    %134 = vmatprep.subr.mxu0 0.0
    %135 = vmatpush1.msra.mxu0 0.0
    %136 = vmatprep.subr.mxu0 0.0
    %137 = vmatpush1.msra.mxu0 0.0
    %138 = vmatprep.mubr.f32.mxu0 0.0
    %v139 = vand.u32 %v41, 4294901760
    %v140 = vsub.f32 %v41, %v139
    %v141 = vand.u32 %v140, 4294901760
    %v142 = vsub.f32 %v140, %v141
    %v143 = vand.u32 %v142, 4294901760
    %144 = vmatmul.mubr.f32.gmra.mrb[0].mxu0 %v143
    %v145 = vpop.f32.mrb[0].mxu0
    %v146 = vadd.f32 0.0, %v145
    %v147 = vpop.f32.mrb[0].mxu0
    %148 = vdwg.mxu0
    %149 = vmatprep.subr.mxu0 0.0
    %v150 = vand.u32 %v42, 4294901760
    %v151 = vsub.f32 %v42, %v150
    %v152 = vand.u32 %v151, 4294901760
    %v153 = vsub.f32 %v151, %v152
    %v154 = vand.u32 %v153, 4294901760
    %155 = vmatpush1.msra.mxu0 %v154
    %156 = vmatprep.subr.mxu0 0.0
    %v157 = vand.u32 %v43, 4294901760
    %v158 = vsub.f32 %v43, %v157
    %v159 = vand.u32 %v158, 4294901760
    %v160 = vsub.f32 %v158, %v159
    %v161 = vand.u32 %v160, 4294901760
    %162 = vmatpush1.msra.mxu0 %v161
    %163 = vmatprep.subr.mxu0 0.0
    %v164 = vand.u32 %v44, 4294901760
    %v165 = vsub.f32 %v44, %v164
    %v166 = vand.u32 %v165, 4294901760
    %v167 = vsub.f32 %v165, %v166
    %v168 = vand.u32 %v167, 4294901760
    %169 = vmatpush1.msra.mxu0 %v168
    %170 = vmatprep.subr.mxu0 0.0
    %v171 = vand.u32 %v45, 4294901760
    %v172 = vsub.f32 %v45, %v171
    %v173 = vand.u32 %v172, 4294901760
    %v174 = vsub.f32 %v172, %v173
    %v175 = vand.u32 %v174, 4294901760
    %176 = vmatpush1.msra.mxu0 %v175
    %177 = vmatprep.subr.mxu0 0.0
    %v178 = vand.u32 %v46, 4294901760
    %v179 = vsub.f32 %v46, %v178
    %v180 = vand.u32 %v179, 4294901760
    %v181 = vsub.f32 %v179, %v180
    %v182 = vand.u32 %v181, 4294901760
    %183 = vmatpush1.msra.mxu0 %v182
    %184 = vmatprep.subr.mxu0 0.0
    %v185 = vand.u32 %v47, 4294901760
    %v186 = vsub.f32 %v47, %v185
    %v187 = vand.u32 %v186, 4294901760
    %v188 = vsub.f32 %v186, %v187
    %v189 = vand.u32 %v188, 4294901760
    %190 = vmatpush1.msra.mxu0 %v189
    %191 = vmatprep.subr.mxu0 0.0
    %v192 = vand.u32 %v48, 4294901760
    %v193 = vsub.f32 %v48, %v192
    %v194 = vand.u32 %v193, 4294901760
    %v195 = vsub.f32 %v193, %v194
    %v196 = vand.u32 %v195, 4294901760
    %197 = vmatpush1.msra.mxu0 %v196
    %198 = vmatprep.subr.mxu0 0.0
    %v199 = vand.u32 %v49, 4294901760
    %v200 = vsub.f32 %v49, %v199
    %v201 = vand.u32 %v200, 4294901760
    %v202 = vsub.f32 %v200, %v201
    %v203 = vand.u32 %v202, 4294901760
    %204 = vmatpush1.msra.mxu0 %v203
    %205 = vmatprep.subr.mxu0 0.0
    %v206 = vand.u32 %v50, 4294901760
    %v207 = vsub.f32 %v50, %v206
    %v208 = vand.u32 %v207, 4294901760
    %v209 = vsub.f32 %v207, %v208
    %v210 = vand.u32 %v209, 4294901760
    %211 = vmatpush1.msra.mxu0 %v210
    %212 = vmatprep.subr.mxu0 0.0
    %v213 = vand.u32 %v51, 4294901760
    %v214 = vsub.f32 %v51, %v213
    %v215 = vand.u32 %v214, 4294901760
    %v216 = vsub.f32 %v214, %v215
    %v217 = vand.u32 %v216, 4294901760
    %218 = vmatpush1.msra.mxu0 %v217
    %219 = vmatprep.subr.mxu0 0.0
    %v220 = vand.u32 %v52, 4294901760
    %v221 = vsub.f32 %v52, %v220
    %v222 = vand.u32 %v221, 4294901760
    %v223 = vsub.f32 %v221, %v222
    %v224 = vand.u32 %v223, 4294901760
    %225 = vmatpush1.msra.mxu0 %v224
    %226 = vmatprep.subr.mxu0 0.0
    %v227 = vand.u32 %v53, 4294901760
    %v228 = vsub.f32 %v53, %v227
    %v229 = vand.u32 %v228, 4294901760
    %v230 = vsub.f32 %v228, %v229
    %v231 = vand.u32 %v230, 4294901760
    %232 = vmatpush1.msra.mxu0 %v231
    %233 = vmatprep.subr.mxu0 0.0
    %v234 = vand.u32 %v54, 4294901760
    %v235 = vsub.f32 %v54, %v234
    %v236 = vand.u32 %v235, 4294901760
    %v237 = vsub.f32 %v235, %v236
    %v238 = vand.u32 %v237, 4294901760
    %239 = vmatpush1.msra.mxu0 %v238
    %240 = vmatprep.subr.mxu0 0.0
    %v241 = vand.u32 %v55, 4294901760
    %v242 = vsub.f32 %v55, %v241
    %v243 = vand.u32 %v242, 4294901760
    %v244 = vsub.f32 %v242, %v243
    %v245 = vand.u32 %v244, 4294901760
    %246 = vmatpush1.msra.mxu0 %v245
    %247 = vmatprep.subr.mxu0 0.0
    %v248 = vand.u32 %v56, 4294901760
    %v249 = vsub.f32 %v56, %v248
    %v250 = vand.u32 %v249, 4294901760
    %v251 = vsub.f32 %v249, %v250
    %v252 = vand.u32 %v251, 4294901760
    %253 = vmatpush1.msra.mxu0 %v252
    %254 = vmatprep.subr.mxu0 0.0
    %v255 = vand.u32 %v57, 4294901760
    %v256 = vsub.f32 %v57, %v255
    %v257 = vand.u32 %v256, 4294901760
    %v258 = vsub.f32 %v256, %v257
    %v259 = vand.u32 %v258, 4294901760
    %260 = vmatpush1.msra.mxu0 %v259
    %261 = vmatprep.subr.mxu0 0.0
    %262 = vmatpush1.msra.mxu0 0.0
    %263 = vmatprep.subr.mxu0 0.0
    %264 = vmatpush1.msra.mxu0 0.0
    %265 = vmatprep.subr.mxu0 0.0
    %266 = vmatpush1.msra.mxu0 0.0
    %267 = vmatprep.subr.mxu0 0.0
    %268 = vmatpush1.msra.mxu0 0.0
    %269 = vmatprep.subr.mxu0 0.0
    %270 = vmatpush1.msra.mxu0 0.0
    %271 = vmatprep.subr.mxu0 0.0
    %272 = vmatpush1.msra.mxu0 0.0
    %273 = vmatprep.subr.mxu0 0.0
    %274 = vmatpush1.msra.mxu0 0.0
    %275 = vmatprep.subr.mxu0 0.0
    %276 = vmatpush1.msra.mxu0 0.0
    %277 = vmatprep.subr.mxu0 0.0
    %278 = vmatpush1.msra.mxu0 0.0
    %279 = vmatprep.subr.mxu0 0.0
    %280 = vmatpush1.msra.mxu0 0.0
    %281 = vmatprep.subr.mxu0 0.0
    %282 = vmatpush1.msra.mxu0 0.0
    %283 = vmatprep.subr.mxu0 0.0
    %284 = vmatpush1.msra.mxu0 0.0
    %285 = vmatprep.subr.mxu0 0.0
    %286 = vmatpush1.msra.mxu0 0.0
    %287 = vmatprep.subr.mxu0 0.0
    %288 = vmatpush1.msra.mxu0 0.0
    %289 = vmatprep.subr.mxu0 0.0
    %290 = vmatpush1.msra.mxu0 0.0
    %291 = vmatprep.subr.mxu0 0.0
    %292 = vmatpush1.msra.mxu0 0.0
    %293 = vmatprep.mubr.f32.mxu0 0.0
    %v294 = vand.u32 %v41, 4294901760
    %295 = vmatmul.mubr.f32.gmra.mrb[0].mxu0 %v294
    %v296 = vpop.f32.mrb[0].mxu0
    %v297 = vadd.f32 %v146, %v296
    %v298 = vpop.f32.mrb[0].mxu0
    %299 = vdwg.mxu0
    %300 = vmatprep.subr.mxu0 0.0
    %v301 = vand.u32 %v42, 4294901760
    %v302 = vsub.f32 %v42, %v301
    %303 = vmatpush1.msra.mxu0 %v302
    %304 = vmatprep.subr.mxu0 0.0
    %v305 = vand.u32 %v43, 4294901760
    %v306 = vsub.f32 %v43, %v305
    %307 = vmatpush1.msra.mxu0 %v306
    %308 = vmatprep.subr.mxu0 0.0
    %v309 = vand.u32 %v44, 4294901760
    %v310 = vsub.f32 %v44, %v309
    %311 = vmatpush1.msra.mxu0 %v310
    %312 = vmatprep.subr.mxu0 0.0
    %v313 = vand.u32 %v45, 4294901760
    %v314 = vsub.f32 %v45, %v313
    %315 = vmatpush1.msra.mxu0 %v314
    %316 = vmatprep.subr.mxu0 0.0
    %v317 = vand.u32 %v46, 4294901760
    %v318 = vsub.f32 %v46, %v317
    %319 = vmatpush1.msra.mxu0 %v318
    %320 = vmatprep.subr.mxu0 0.0
    %v321 = vand.u32 %v47, 4294901760
    %v322 = vsub.f32 %v47, %v321
    %323 = vmatpush1.msra.mxu0 %v322
    %324 = vmatprep.subr.mxu0 0.0
    %v325 = vand.u32 %v48, 4294901760
    %v326 = vsub.f32 %v48, %v325
    %327 = vmatpush1.msra.mxu0 %v326
    %328 = vmatprep.subr.mxu0 0.0
    %v329 = vand.u32 %v49, 4294901760
    %v330 = vsub.f32 %v49, %v329
    %331 = vmatpush1.msra.mxu0 %v330
    %332 = vmatprep.subr.mxu0 0.0
    %v333 = vand.u32 %v50, 4294901760
    %v334 = vsub.f32 %v50, %v333
    %335 = vmatpush1.msra.mxu0 %v334
    %336 = vmatprep.subr.mxu0 0.0
    %v337 = vand.u32 %v51, 4294901760
    %v338 = vsub.f32 %v51, %v337
    %339 = vmatpush1.msra.mxu0 %v338
    %340 = vmatprep.subr.mxu0 0.0
    %v341 = vand.u32 %v52, 4294901760
    %v342 = vsub.f32 %v52, %v341
    %343 = vmatpush1.msra.mxu0 %v342
    %344 = vmatprep.subr.mxu0 0.0
    %v345 = vand.u32 %v53, 4294901760
    %v346 = vsub.f32 %v53, %v345
    %347 = vmatpush1.msra.mxu0 %v346
    %348 = vmatprep.subr.mxu0 0.0
    %v349 = vand.u32 %v54, 4294901760
    %v350 = vsub.f32 %v54, %v349
    %351 = vmatpush1.msra.mxu0 %v350
    %352 = vmatprep.subr.mxu0 0.0
    %v353 = vand.u32 %v55, 4294901760
    %v354 = vsub.f32 %v55, %v353
    %355 = vmatpush1.msra.mxu0 %v354
    %356 = vmatprep.subr.mxu0 0.0
    %v357 = vand.u32 %v56, 4294901760
    %v358 = vsub.f32 %v56, %v357
    %359 = vmatpush1.msra.mxu0 %v358
    %360 = vmatprep.subr.mxu0 0.0
    %v361 = vand.u32 %v57, 4294901760
    %v362 = vsub.f32 %v57, %v361
    %363 = vmatpush1.msra.mxu0 %v362
    %364 = vmatprep.subr.mxu0 0.0
    %365 = vmatpush1.msra.mxu0 0.0
    %366 = vmatprep.subr.mxu0 0.0
    %367 = vmatpush1.msra.mxu0 0.0
    %368 = vmatprep.subr.mxu0 0.0
    %369 = vmatpush1.msra.mxu0 0.0
    %370 = vmatprep.subr.mxu0 0.0
    %371 = vmatpush1.msra.mxu0 0.0
    %372 = vmatprep.subr.mxu0 0.0
    %373 = vmatpush1.msra.mxu0 0.0
    %374 = vmatprep.subr.mxu0 0.0
    %375 = vmatpush1.msra.mxu0 0.0
    %376 = vmatprep.subr.mxu0 0.0
    %377 = vmatpush1.msra.mxu0 0.0
    %378 = vmatprep.subr.mxu0 0.0
    %379 = vmatpush1.msra.mxu0 0.0
    %380 = vmatprep.subr.mxu0 0.0
    %381 = vmatpush1.msra.mxu0 0.0
    %382 = vmatprep.subr.mxu0 0.0
    %383 = vmatpush1.msra.mxu0 0.0
    %384 = vmatprep.subr.mxu0 0.0
    %385 = vmatpush1.msra.mxu0 0.0
    %386 = vmatprep.subr.mxu0 0.0
    %387 = vmatpush1.msra.mxu0 0.0
    %388 = vmatprep.subr.mxu0 0.0
    %389 = vmatpush1.msra.mxu0 0.0
    %390 = vmatprep.subr.mxu0 0.0
    %391 = vmatpush1.msra.mxu0 0.0
    %392 = vmatprep.subr.mxu0 0.0
    %393 = vmatpush1.msra.mxu0 0.0
    %394 = vmatprep.subr.mxu0 0.0
    %395 = vmatpush1.msra.mxu0 0.0
    %396 = vmatprep.mubr.f32.mxu0 0.0
    %v397 = vand.u32 %v41, 4294901760
    %v398 = vsub.f32 %v41, %v397
    %399 = vmatmul.mubr.f32.gmra.mrb[0].mxu0 %v398
    %v400 = vpop.f32.mrb[0].mxu0
    %v401 = vadd.f32 %v297, %v400
    %v402 = vpop.f32.mrb[0].mxu0
    %403 = vdwg.mxu0
    %404 = vmatprep.subr.mxu0 0.0
    %v405 = vand.u32 %v42, 4294901760
    %406 = vmatpush1.msra.mxu0 %v405
    %407 = vmatprep.subr.mxu0 0.0
    %v408 = vand.u32 %v43, 4294901760
    %409 = vmatpush1.msra.mxu0 %v408
    %410 = vmatprep.subr.mxu0 0.0
    %v411 = vand.u32 %v44, 4294901760
    %412 = vmatpush1.msra.mxu0 %v411
    %413 = vmatprep.subr.mxu0 0.0
    %v414 = vand.u32 %v45, 4294901760
    %415 = vmatpush1.msra.mxu0 %v414
    %416 = vmatprep.subr.mxu0 0.0
    %v417 = vand.u32 %v46, 4294901760
    %418 = vmatpush1.msra.mxu0 %v417
    %419 = vmatprep.subr.mxu0 0.0
    %v420 = vand.u32 %v47, 4294901760
    %421 = vmatpush1.msra.mxu0 %v420
    %422 = vmatprep.subr.mxu0 0.0
    %v423 = vand.u32 %v48, 4294901760
    %424 = vmatpush1.msra.mxu0 %v423
    %425 = vmatprep.subr.mxu0 0.0
    %v426 = vand.u32 %v49, 4294901760
    %427 = vmatpush1.msra.mxu0 %v426
    %428 = vmatprep.subr.mxu0 0.0
    %v429 = vand.u32 %v50, 4294901760
    %430 = vmatpush1.msra.mxu0 %v429
    %431 = vmatprep.subr.mxu0 0.0
    %v432 = vand.u32 %v51, 4294901760
    %433 = vmatpush1.msra.mxu0 %v432
    %434 = vmatprep.subr.mxu0 0.0
    %v435 = vand.u32 %v52, 4294901760
    %436 = vmatpush1.msra.mxu0 %v435
    %437 = vmatprep.subr.mxu0 0.0
    %v438 = vand.u32 %v53, 4294901760
    %439 = vmatpush1.msra.mxu0 %v438
    %440 = vmatprep.subr.mxu0 0.0
    %v441 = vand.u32 %v54, 4294901760
    %442 = vmatpush1.msra.mxu0 %v441
    %443 = vmatprep.subr.mxu0 0.0
    %v444 = vand.u32 %v55, 4294901760
    %445 = vmatpush1.msra.mxu0 %v444
    %446 = vmatprep.subr.mxu0 0.0
    %v447 = vand.u32 %v56, 4294901760
    %448 = vmatpush1.msra.mxu0 %v447
    %449 = vmatprep.subr.mxu0 0.0
    %v450 = vand.u32 %v57, 4294901760
    %451 = vmatpush1.msra.mxu0 %v450
    %452 = vmatprep.subr.mxu0 0.0
    %453 = vmatpush1.msra.mxu0 0.0
    %454 = vmatprep.subr.mxu0 0.0
    %455 = vmatpush1.msra.mxu0 0.0
    %456 = vmatprep.subr.mxu0 0.0
    %457 = vmatpush1.msra.mxu0 0.0
    %458 = vmatprep.subr.mxu0 0.0
    %459 = vmatpush1.msra.mxu0 0.0
    %460 = vmatprep.subr.mxu0 0.0
    %461 = vmatpush1.msra.mxu0 0.0
    %462 = vmatprep.subr.mxu0 0.0
    %463 = vmatpush1.msra.mxu0 0.0
    %464 = vmatprep.subr.mxu0 0.0
    %465 = vmatpush1.msra.mxu0 0.0
    %466 = vmatprep.subr.mxu0 0.0
    %467 = vmatpush1.msra.mxu0 0.0
    %468 = vmatprep.subr.mxu0 0.0
    %469 = vmatpush1.msra.mxu0 0.0
    %470 = vmatprep.subr.mxu0 0.0
    %471 = vmatpush1.msra.mxu0 0.0
    %472 = vmatprep.subr.mxu0 0.0
    %473 = vmatpush1.msra.mxu0 0.0
    %474 = vmatprep.subr.mxu0 0.0
    %475 = vmatpush1.msra.mxu0 0.0
    %476 = vmatprep.subr.mxu0 0.0
    %477 = vmatpush1.msra.mxu0 0.0
    %478 = vmatprep.subr.mxu0 0.0
    %479 = vmatpush1.msra.mxu0 0.0
    %480 = vmatprep.subr.mxu0 0.0
    %481 = vmatpush1.msra.mxu0 0.0
    %482 = vmatprep.subr.mxu0 0.0
    %483 = vmatpush1.msra.mxu0 0.0
    %484 = vmatprep.mubr.f32.mxu0 0.0
    %v485 = vand.u32 %v41, 4294901760
    %v486 = vsub.f32 %v41, %v485
    %v487 = vand.u32 %v486, 4294901760
    %488 = vmatmul.mubr.f32.gmra.mrb[0].mxu0 %v487
    %v489 = vpop.f32.mrb[0].mxu0
    %v490 = vadd.f32 %v401, %v489
    %v491 = vpop.f32.mrb[0].mxu0
    %492 = vdwg.mxu0
    %493 = vmatprep.subr.mxu0 0.0
    %v494 = vand.u32 %v42, 4294901760
    %v495 = vsub.f32 %v42, %v494
    %v496 = vand.u32 %v495, 4294901760
    %497 = vmatpush1.msra.mxu0 %v496
    %498 = vmatprep.subr.mxu0 0.0
    %v499 = vand.u32 %v43, 4294901760
    %v500 = vsub.f32 %v43, %v499
    %v501 = vand.u32 %v500, 4294901760
    %502 = vmatpush1.msra.mxu0 %v501
    %503 = vmatprep.subr.mxu0 0.0
    %v504 = vand.u32 %v44, 4294901760
    %v505 = vsub.f32 %v44, %v504
    %v506 = vand.u32 %v505, 4294901760
    %507 = vmatpush1.msra.mxu0 %v506
    %508 = vmatprep.subr.mxu0 0.0
    %v509 = vand.u32 %v45, 4294901760
    %v510 = vsub.f32 %v45, %v509
    %v511 = vand.u32 %v510, 4294901760
    %512 = vmatpush1.msra.mxu0 %v511
    %513 = vmatprep.subr.mxu0 0.0
    %v514 = vand.u32 %v46, 4294901760
    %v515 = vsub.f32 %v46, %v514
    %v516 = vand.u32 %v515, 4294901760
    %517 = vmatpush1.msra.mxu0 %v516
    %518 = vmatprep.subr.mxu0 0.0
    %v519 = vand.u32 %v47, 4294901760
    %v520 = vsub.f32 %v47, %v519
    %v521 = vand.u32 %v520, 4294901760
    %522 = vmatpush1.msra.mxu0 %v521
    %523 = vmatprep.subr.mxu0 0.0
    %v524 = vand.u32 %v48, 4294901760
    %v525 = vsub.f32 %v48, %v524
    %v526 = vand.u32 %v525, 4294901760
    %527 = vmatpush1.msra.mxu0 %v526
    %528 = vmatprep.subr.mxu0 0.0
    %v529 = vand.u32 %v49, 4294901760
    %v530 = vsub.f32 %v49, %v529
    %v531 = vand.u32 %v530, 4294901760
    %532 = vmatpush1.msra.mxu0 %v531
    %533 = vmatprep.subr.mxu0 0.0
    %v534 = vand.u32 %v50, 4294901760
    %v535 = vsub.f32 %v50, %v534
    %v536 = vand.u32 %v535, 4294901760
    %537 = vmatpush1.msra.mxu0 %v536
    %538 = vmatprep.subr.mxu0 0.0
    %v539 = vand.u32 %v51, 4294901760
    %v540 = vsub.f32 %v51, %v539
    %v541 = vand.u32 %v540, 4294901760
    %542 = vmatpush1.msra.mxu0 %v541
    %543 = vmatprep.subr.mxu0 0.0
    %v544 = vand.u32 %v52, 4294901760
    %v545 = vsub.f32 %v52, %v544
    %v546 = vand.u32 %v545, 4294901760
    %547 = vmatpush1.msra.mxu0 %v546
    %548 = vmatprep.subr.mxu0 0.0
    %v549 = vand.u32 %v53, 4294901760
    %v550 = vsub.f32 %v53, %v549
    %v551 = vand.u32 %v550, 4294901760
    %552 = vmatpush1.msra.mxu0 %v551
    %553 = vmatprep.subr.mxu0 0.0
    %v554 = vand.u32 %v54, 4294901760
    %v555 = vsub.f32 %v54, %v554
    %v556 = vand.u32 %v555, 4294901760
    %557 = vmatpush1.msra.mxu0 %v556
    %558 = vmatprep.subr.mxu0 0.0
    %v559 = vand.u32 %v55, 4294901760
    %v560 = vsub.f32 %v55, %v559
    %v561 = vand.u32 %v560, 4294901760
    %562 = vmatpush1.msra.mxu0 %v561
    %563 = vmatprep.subr.mxu0 0.0
    %v564 = vand.u32 %v56, 4294901760
    %v565 = vsub.f32 %v56, %v564
    %v566 = vand.u32 %v565, 4294901760
    %567 = vmatpush1.msra.mxu0 %v566
    %568 = vmatprep.subr.mxu0 0.0
    %v569 = vand.u32 %v57, 4294901760
    %v570 = vsub.f32 %v57, %v569
    %v571 = vand.u32 %v570, 4294901760
    %572 = vmatpush1.msra.mxu0 %v571
    %573 = vmatprep.subr.mxu0 0.0
    %574 = vmatpush1.msra.mxu0 0.0
    %575 = vmatprep.subr.mxu0 0.0
    %576 = vmatpush1.msra.mxu0 0.0
    %577 = vmatprep.subr.mxu0 0.0
    %578 = vmatpush1.msra.mxu0 0.0
    %579 = vmatprep.subr.mxu0 0.0
    %580 = vmatpush1.msra.mxu0 0.0
    %581 = vmatprep.subr.mxu0 0.0
    %582 = vmatpush1.msra.mxu0 0.0
    %583 = vmatprep.subr.mxu0 0.0
    %584 = vmatpush1.msra.mxu0 0.0
    %585 = vmatprep.subr.mxu0 0.0
    %586 = vmatpush1.msra.mxu0 0.0
    %587 = vmatprep.subr.mxu0 0.0
    %588 = vmatpush1.msra.mxu0 0.0
    %589 = vmatprep.subr.mxu0 0.0
    %590 = vmatpush1.msra.mxu0 0.0
    %591 = vmatprep.subr.mxu0 0.0
    %592 = vmatpush1.msra.mxu0 0.0
    %593 = vmatprep.subr.mxu0 0.0
    %594 = vmatpush1.msra.mxu0 0.0
    %595 = vmatprep.subr.mxu0 0.0
    %596 = vmatpush1.msra.mxu0 0.0
    %597 = vmatprep.subr.mxu0 0.0
    %598 = vmatpush1.msra.mxu0 0.0
    %599 = vmatprep.subr.mxu0 0.0
    %600 = vmatpush1.msra.mxu0 0.0
    %601 = vmatprep.subr.mxu0 0.0
    %602 = vmatpush1.msra.mxu0 0.0
    %603 = vmatprep.subr.mxu0 0.0
    %604 = vmatpush1.msra.mxu0 0.0
    %605 = vmatprep.mubr.f32.mxu0 0.0
    %v606 = vand.u32 %v41, 4294901760
    %607 = vmatmul.mubr.f32.gmra.mrb[0].mxu0 %v606
    %v608 = vpop.f32.mrb[0].mxu0
    %v609 = vadd.f32 %v490, %v608
    %v610 = vpop.f32.mrb[0].mxu0
    %611 = vdwg.mxu0
    %612 = vmatprep.subr.mxu0 0.0
    %v613 = vand.u32 %v42, 4294901760
    %614 = vmatpush1.msra.mxu0 %v613
    %615 = vmatprep.subr.mxu0 0.0
    %v616 = vand.u32 %v43, 4294901760
    %617 = vmatpush1.msra.mxu0 %v616
    %618 = vmatprep.subr.mxu0 0.0
    %v619 = vand.u32 %v44, 4294901760
    %620 = vmatpush1.msra.mxu0 %v619
    %621 = vmatprep.subr.mxu0 0.0
    %v622 = vand.u32 %v45, 4294901760
    %623 = vmatpush1.msra.mxu0 %v622
    %624 = vmatprep.subr.mxu0 0.0
    %v625 = vand.u32 %v46, 4294901760
    %626 = vmatpush1.msra.mxu0 %v625
    %627 = vmatprep.subr.mxu0 0.0
    %v628 = vand.u32 %v47, 4294901760
    %629 = vmatpush1.msra.mxu0 %v628
    %630 = vmatprep.subr.mxu0 0.0
    %v631 = vand.u32 %v48, 4294901760
    %632 = vmatpush1.msra.mxu0 %v631
    %633 = vmatprep.subr.mxu0 0.0
    %v634 = vand.u32 %v49, 4294901760
    %635 = vmatpush1.msra.mxu0 %v634
    %636 = vmatprep.subr.mxu0 0.0
    %v637 = vand.u32 %v50, 4294901760
    %638 = vmatpush1.msra.mxu0 %v637
    %639 = vmatprep.subr.mxu0 0.0
    %v640 = vand.u32 %v51, 4294901760
    %641 = vmatpush1.msra.mxu0 %v640
    %642 = vmatprep.subr.mxu0 0.0
    %v643 = vand.u32 %v52, 4294901760
    %644 = vmatpush1.msra.mxu0 %v643
    %645 = vmatprep.subr.mxu0 0.0
    %v646 = vand.u32 %v53, 4294901760
    %647 = vmatpush1.msra.mxu0 %v646
    %648 = vmatprep.subr.mxu0 0.0
    %v649 = vand.u32 %v54, 4294901760
    %650 = vmatpush1.msra.mxu0 %v649
    %651 = vmatprep.subr.mxu0 0.0
    %v652 = vand.u32 %v55, 4294901760
    %653 = vmatpush1.msra.mxu0 %v652
    %654 = vmatprep.subr.mxu0 0.0
    %v655 = vand.u32 %v56, 4294901760
    %656 = vmatpush1.msra.mxu0 %v655
    %657 = vmatprep.subr.mxu0 0.0
    %v658 = vand.u32 %v57, 4294901760
    %659 = vmatpush1.msra.mxu0 %v658
    %660 = vmatprep.subr.mxu0 0.0
    %661 = vmatpush1.msra.mxu0 0.0
    %662 = vmatprep.subr.mxu0 0.0
    %663 = vmatpush1.msra.mxu0 0.0
    %664 = vmatprep.subr.mxu0 0.0
    %665 = vmatpush1.msra.mxu0 0.0
    %666 = vmatprep.subr.mxu0 0.0
    %667 = vmatpush1.msra.mxu0 0.0
    %668 = vmatprep.subr.mxu0 0.0
    %669 = vmatpush1.msra.mxu0 0.0
    %670 = vmatprep.subr.mxu0 0.0
    %671 = vmatpush1.msra.mxu0 0.0
    %672 = vmatprep.subr.mxu0 0.0
    %673 = vmatpush1.msra.mxu0 0.0
    %674 = vmatprep.subr.mxu0 0.0
    %675 = vmatpush1.msra.mxu0 0.0
    %676 = vmatprep.subr.mxu0 0.0
    %677 = vmatpush1.msra.mxu0 0.0
    %678 = vmatprep.subr.mxu0 0.0
    %679 = vmatpush1.msra.mxu0 0.0
    %680 = vmatprep.subr.mxu0 0.0
    %681 = vmatpush1.msra.mxu0 0.0
    %682 = vmatprep.subr.mxu0 0.0
    %683 = vmatpush1.msra.mxu0 0.0
    %684 = vmatprep.subr.mxu0 0.0
    %685 = vmatpush1.msra.mxu0 0.0
    %686 = vmatprep.subr.mxu0 0.0
    %687 = vmatpush1.msra.mxu0 0.0
    %688 = vmatprep.subr.mxu0 0.0
    %689 = vmatpush1.msra.mxu0 0.0
    %690 = vmatprep.subr.mxu0 0.0
    %691 = vmatpush1.msra.mxu0 0.0
    %692 = vmatprep.mubr.f32.mxu0 0.0
    %v693 = vand.u32 %v41, 4294901760
    %694 = vmatmul.mubr.f32.gmra.mrb[0].mxu0 %v693
    %v695 = vpop.f32.mrb[0].mxu0
    %v696 = vadd.f32 %v609, %v695
    %v697 = vpop.f32.mrb[0].mxu0
    %698 = vdwg.mxu0
    %699 = vst [vmem:[#allocation8] sm:$0xff] %v696
    %v700 = vsub.f32 %v41, %v696
    %701 = vst [vmem:[#allocation7] sm:$0xff] %v700
    // Predicated region
    $region18: #{tpu_custom_call.1} parent=1 // pred_check
      _
    $region19: #{tpu_custom_call.1} parent=1 // pred_check_branch
      %703 = sbr.rel (0) target = $region21
    $region20: #{tpu_custom_call.1} parent=1 // pred_region
      %s705 = ssub.s32 128, 128
      %706 = vsyncadd [#allocation4], %s705
      %s708 = sshll.u32 [#allocation7], 4
      %s709 = int_to_ptr.vmem [resolvable:$true] %s708
      %711 = dma.vmem_to_hbm [thread:$0]  %s709, 128, %s2, [#allocation4]
    $region21: #{tpu_custom_call.1} parent=1 // pred_fallthru
      _
    // Predicated region
    $region22: #{tpu_custom_call.1} parent=1 // pred_check
      _
    $region23: #{tpu_custom_call.1} parent=1 // pred_check_branch
      %713 = sbr.rel (0) target = $region25
    $region24: #{tpu_custom_call.1} parent=1 // pred_region
      %s715 = ssub.s32 128, 128
      %716 = vsyncadd [#allocation9], %s715
      %s718 = sshll.u32 [#allocation8], 4
      %s719 = int_to_ptr.vmem [resolvable:$true] %s718
      %721 = dma.vmem_to_hbm [thread:$0]  %s719, 128, %s3, [#allocation9]
    $region25: #{tpu_custom_call.1} parent=1 // pred_fallthru
      _
    // Predicated region
    $region26: #{tpu_custom_call.1} parent=1 // pred_check
      _
    $region27: #{tpu_custom_call.1} parent=1 // pred_check_branch
      %723 = sbr.rel (0) target = $region29
    $region28: #{tpu_custom_call.1} parent=1 // pred_region
      %724 = dma.done [#allocation4], 128
    $region29: #{tpu_custom_call.1} parent=1 // pred_fallthru
      _
    // Predicated region
    $region30: #{tpu_custom_call.1} parent=1 // pred_check
      _
    $region31: #{tpu_custom_call.1} parent=1 // pred_check_branch
      %726 = sbr.rel (0) target = $region33
    $region32: #{tpu_custom_call.1} parent=1 // pred_region
      %727 = dma.done [#allocation9], 128
    $region33: #{tpu_custom_call.1} parent=1 // pred_fallthru
      _
    %728 = vsyncpa [#allocation3], 1
    %729 = vsyncpa [#allocation6], 1
    %730 = vsyncpa [#allocation4], 1
    %731 = vsyncpa [#allocation9], 1

// kernel: tpu_custom_call.1
$region0: #{tpu_custom_call.1}
  #allocation0 [shape = 'u32[]', space=smem, size = 0x4, offset = 0x4, fixed_abs, tag = 'smem constant byte address 0x4 - core index']
  #allocation1 [shape = 'u32[144,128]{1,0:T(1,128)}', space=vmem, size = 0x12000, scoped, tag = 'internal scratch']
  %s0 = inlined_call_operand.hbm [shape: f32[8,128], index: 0, kind: input, shape index: {}]
  %s1 = inlined_call_operand.hbm [shape: f32[128,128], index: 1, kind: input, shape index: {}]
  %s2 = inlined_call_operand.hbm [shape: f32[8,128], index: 2, kind: output, shape index: {0}]
  %s3 = inlined_call_operand.hbm [shape: f32[8,128], index: 3, kind: output, shape index: {1}]
  %4 = xla_tuple %s2, %s3
  %s5 = sld [smem:[#allocation0]]
  $region34: #{tpu_custom_call.1} parent=0
    _
  %s7 = ssub.s32 1, %s5
  %s8 = scalar_select 0, %s7, %s5
  $region1: #{tpu_custom_call.1} parent=0
    #allocation2 [shape = 'u8[4096]{0}', space=vmem, size = 0x1000, scoped, tag = 'input window, operand 0, single buffered']
    #allocation3 [shape = 's32[1]{0}', space=sflag, size = 0x4, scoped, tag = 'scoped memory for tpu_custom_call.1']
    #allocation4 [shape = 's32[1]{0}', space=sflag, size = 0x4, scoped, tag = 'scoped memory for tpu_custom_call.1']
    #allocation5 [shape = 'u8[65536]{0}', space=vmem, size = 0x10000, scoped, tag = 'input window, operand 1, single buffered']
    #allocation6 [shape = 's32[1]{0}', space=sflag, size = 0x4, scoped, tag = 'scoped memory for tpu_custom_call.1']
    #allocation7 [shape = 'u8[4096]{0}', space=vmem, size = 0x1000, scoped, tag = 'output window, operand 0, single buffered']
    #allocation8 [shape = 'u8[4096]{0}', space=vmem, size = 0x1000, scoped, tag = 'output window, operand 1, single buffered']
    #allocation9 [shape = 's32[1]{0}', space=sflag, size = 0x4, scoped, tag = 'scoped memory for tpu_custom_call.1']
    %9 = vsyncpa [#allocation3], 0
    %10 = vsyncpa [#allocation6], 0
    %11 = vsyncpa [#allocation4], 0
    %12 = vsyncpa [#allocation9], 0
    // Predicated region
    $region2: #{tpu_custom_call.1} parent=1 // pred_check
      _
    $region3: #{tpu_custom_call.1} parent=1 // pred_check_branch
      %14 = sbr.rel (0) target = $region5
    $region4: #{tpu_custom_call.1} parent=1 // pred_region
      %s16 = ssub.s32 128, 128
      %17 = vsyncadd [#allocation3], %s16
      %s19 = sshll.u32 [#allocation2], 4
      %s20 = int_to_ptr.vmem [resolvable:$true] %s19
      %22 = dma.hbm_to_vmem [thread:$0]  %s0, 128, %s20, [#allocation3]
    $region5: #{tpu_custom_call.1} parent=1 // pred_fallthru
      _
    // Predicated region
    $region6: #{tpu_custom_call.1} parent=1 // pred_check
      _
    $region7: #{tpu_custom_call.1} parent=1 // pred_check_branch
      %24 = sbr.rel (0) target = $region9
    $region8: #{tpu_custom_call.1} parent=1 // pred_region
      %s26 = ssub.s32 2048, 2048
      %27 = vsyncadd [#allocation6], %s26
      %s28 = sshll.u32 [#allocation5], 4
      %s29 = int_to_ptr.vmem [resolvable:$true] %s28
      %34 = dma.hbm_to_vmem [thread:$0]  %s1, 2048, %s29, [#allocation6], 128, 128, 8
    $region9: #{tpu_custom_call.1} parent=1 // pred_fallthru
      _
    // Predicated region
    $region10: #{tpu_custom_call.1} parent=1 // pred_check
      _
    $region11: #{tpu_custom_call.1} parent=1 // pred_check_branch
      %36 = sbr.rel (0) target = $region13
    $region12: #{tpu_custom_call.1} parent=1 // pred_region
      %37 = dma.done [#allocation3], 128
    $region13: #{tpu_custom_call.1} parent=1 // pred_fallthru
      _
    // Predicated region
    $region14: #{tpu_custom_call.1} parent=1 // pred_check
      _
    $region15: #{tpu_custom_call.1} parent=1 // pred_check_branch
      %39 = sbr.rel (0) target = $region17
    $region16: #{tpu_custom_call.1} parent=1 // pred_region
      %40 = dma.done [#allocation6], 2048
    $region17: #{tpu_custom_call.1} parent=1 // pred_fallthru
      _
    %v41 = vld [vmem:[#allocation2] sm:$0xff]
    %v42 = vld [vmem:[#allocation5] sm:$0xff]
    %v43 = vld [vmem:[#allocation5 + $0x8] sm:$0xff]
    %v44 = vld [vmem:[#allocation5 + $0x10] sm:$0xff]
    %v45 = vld [vmem:[#allocation5 + $0x18] sm:$0xff]
    %v46 = vld [vmem:[#allocation5 + $0x20] sm:$0xff]
    %v47 = vld [vmem:[#allocation5 + $0x28] sm:$0xff]
    %v48 = vld [vmem:[#allocation5 + $0x30] sm:$0xff]
    %v49 = vld [vmem:[#allocation5 + $0x38] sm:$0xff]
    %v50 = vld [vmem:[#allocation5 + $0x40] sm:$0xff]
    %v51 = vld [vmem:[#allocation5 + $0x48] sm:$0xff]
    %v52 = vld [vmem:[#allocation5 + $0x50] sm:$0xff]
    %v53 = vld [vmem:[#allocation5 + $0x58] sm:$0xff]
    %v54 = vld [vmem:[#allocation5 + $0x60] sm:$0xff]
    %v55 = vld [vmem:[#allocation5 + $0x68] sm:$0xff]
    %v56 = vld [vmem:[#allocation5 + $0x70] sm:$0xff]
    %v57 = vld [vmem:[#allocation5 + $0x78] sm:$0xff]
    %58 = vmatprep.subr.mxu0 0.0
    %v59 = vand.u32 %v42, 4294901760
    %60 = vmatpush1.msra.mxu0 %v59
    %61 = vmatprep.subr.mxu0 0.0
    %v62 = vand.u32 %v43, 4294901760
    %63 = vmatpush1.msra.mxu0 %v62
    %64 = vmatprep.subr.mxu0 0.0
    %v65 = vand.u32 %v44, 4294901760
    %66 = vmatpush1.msra.mxu0 %v65
    %67 = vmatprep.subr.mxu0 0.0
    %v68 = vand.u32 %v45, 4294901760
    %69 = vmatpush1.msra.mxu0 %v68
    %70 = vmatprep.subr.mxu0 0.0
    %v71 = vand.u32 %v46, 4294901760
    %72 = vmatpush1.msra.mxu0 %v71
    %73 = vmatprep.subr.mxu0 0.0
    %v74 = vand.u32 %v47, 4294901760
    %75 = vmatpush1.msra.mxu0 %v74
    %76 = vmatprep.subr.mxu0 0.0
    %v77 = vand.u32 %v48, 4294901760
    %78 = vmatpush1.msra.mxu0 %v77
    %79 = vmatprep.subr.mxu0 0.0
    %v80 = vand.u32 %v49, 4294901760
    %81 = vmatpush1.msra.mxu0 %v80
    %82 = vmatprep.subr.mxu0 0.0
    %v83 = vand.u32 %v50, 4294901760
    %84 = vmatpush1.msra.mxu0 %v83
    %85 = vmatprep.subr.mxu0 0.0
    %v86 = vand.u32 %v51, 4294901760
    %87 = vmatpush1.msra.mxu0 %v86
    %88 = vmatprep.subr.mxu0 0.0
    %v89 = vand.u32 %v52, 4294901760
    %90 = vmatpush1.msra.mxu0 %v89
    %91 = vmatprep.subr.mxu0 0.0
    %v92 = vand.u32 %v53, 4294901760
    %93 = vmatpush1.msra.mxu0 %v92
    %94 = vmatprep.subr.mxu0 0.0
    %v95 = vand.u32 %v54, 4294901760
    %96 = vmatpush1.msra.mxu0 %v95
    %97 = vmatprep.subr.mxu0 0.0
    %v98 = vand.u32 %v55, 4294901760
    %99 = vmatpush1.msra.mxu0 %v98
    %100 = vmatprep.subr.mxu0 0.0
    %v101 = vand.u32 %v56, 4294901760
    %102 = vmatpush1.msra.mxu0 %v101
    %103 = vmatprep.subr.mxu0 0.0
    %v104 = vand.u32 %v57, 4294901760
    %105 = vmatpush1.msra.mxu0 %v104
    %106 = vmatprep.subr.mxu0 0.0
    %107 = vmatpush1.msra.mxu0 0.0
    %108 = vmatprep.subr.mxu0 0.0
    %109 = vmatpush1.msra.mxu0 0.0
    %110 = vmatprep.subr.mxu0 0.0
    %111 = vmatpush1.msra.mxu0 0.0
    %112 = vmatprep.subr.mxu0 0.0
    %113 = vmatpush1.msra.mxu0 0.0
    %114 = vmatprep.subr.mxu0 0.0
    %115 = vmatpush1.msra.mxu0 0.0
    %116 = vmatprep.subr.mxu0 0.0
    %117 = vmatpush1.msra.mxu0 0.0
    %118 = vmatprep.subr.mxu0 0.0
    %119 = vmatpush1.msra.mxu0 0.0
    %120 = vmatprep.subr.mxu0 0.0
    %121 = vmatpush1.msra.mxu0 0.0
    %122 = vmatprep.subr.mxu0 0.0
    %123 = vmatpush1.msra.mxu0 0.0
    %124 = vmatprep.subr.mxu0 0.0
    %125 = vmatpush1.msra.mxu0 0.0
    %126 = vmatprep.subr.mxu0 0.0
    %127 = vmatpush1.msra.mxu0 0.0
    %128 = vmatprep.subr.mxu0 0.0
    %129 = vmatpush1.msra.mxu0 0.0
    %130 = vmatprep.subr.mxu0 0.0
    %131 = vmatpush1.msra.mxu0 0.0
    %132 = vmatprep.subr.mxu0 0.0
    %133 = vmatpush1.msra.mxu0 0.0
    %134 = vmatprep.subr.mxu0 0.0
    %135 = vmatpush1.msra.mxu0 0.0
    %136 = vmatprep.subr.mxu0 0.0
    %137 = vmatpush1.msra.mxu0 0.0
    %138 = vmatprep.mubr.f32.mxu0 0.0
    %v139 = vand.u32 %v41, 4294901760
    %v140 = vsub.f32 %v41, %v139
    %v141 = vand.u32 %v140, 4294901760
    %v142 = vsub.f32 %v140, %v141
    %v143 = vand.u32 %v142, 4294901760
    %144 = vmatmul.mubr.f32.gmra.mrb[0].mxu0 %v143
    %v145 = vpop.f32.mrb[0].mxu0
    %v146 = vadd.f32 0.0, %v145
    %v147 = vpop.f32.mrb[0].mxu0
    %148 = vdwg.mxu0
    %149 = vmatprep.subr.mxu0 0.0
    %v150 = vand.u32 %v42, 4294901760
    %v151 = vsub.f32 %v42, %v150
    %v152 = vand.u32 %v151, 4294901760
    %v153 = vsub.f32 %v151, %v152
    %v154 = vand.u32 %v153, 4294901760
    %155 = vmatpush1.msra.mxu0 %v154
    %156 = vmatprep.subr.mxu0 0.0
    %v157 = vand.u32 %v43, 4294901760
    %v158 = vsub.f32 %v43, %v157
    %v159 = vand.u32 %v158, 4294901760
    %v160 = vsub.f32 %v158, %v159
    %v161 = vand.u32 %v160, 4294901760
    %162 = vmatpush1.msra.mxu0 %v161
    %163 = vmatprep.subr.mxu0 0.0
    %v164 = vand.u32 %v44, 4294901760
    %v165 = vsub.f32 %v44, %v164
    %v166 = vand.u32 %v165, 4294901760
    %v167 = vsub.f32 %v165, %v166
    %v168 = vand.u32 %v167, 4294901760
    %169 = vmatpush1.msra.mxu0 %v168
    %170 = vmatprep.subr.mxu0 0.0
    %v171 = vand.u32 %v45, 4294901760
    %v172 = vsub.f32 %v45, %v171
    %v173 = vand.u32 %v172, 4294901760
    %v174 = vsub.f32 %v172, %v173
    %v175 = vand.u32 %v174, 4294901760
    %176 = vmatpush1.msra.mxu0 %v175
    %177 = vmatprep.subr.mxu0 0.0
    %v178 = vand.u32 %v46, 4294901760
    %v179 = vsub.f32 %v46, %v178
    %v180 = vand.u32 %v179, 4294901760
    %v181 = vsub.f32 %v179, %v180
    %v182 = vand.u32 %v181, 4294901760
    %183 = vmatpush1.msra.mxu0 %v182
    %184 = vmatprep.subr.mxu0 0.0
    %v185 = vand.u32 %v47, 4294901760
    %v186 = vsub.f32 %v47, %v185
    %v187 = vand.u32 %v186, 4294901760
    %v188 = vsub.f32 %v186, %v187
    %v189 = vand.u32 %v188, 4294901760
    %190 = vmatpush1.msra.mxu0 %v189
    %191 = vmatprep.subr.mxu0 0.0
    %v192 = vand.u32 %v48, 4294901760
    %v193 = vsub.f32 %v48, %v192
    %v194 = vand.u32 %v193, 4294901760
    %v195 = vsub.f32 %v193, %v194
    %v196 = vand.u32 %v195, 4294901760
    %197 = vmatpush1.msra.mxu0 %v196
    %198 = vmatprep.subr.mxu0 0.0
    %v199 = vand.u32 %v49, 4294901760
    %v200 = vsub.f32 %v49, %v199
    %v201 = vand.u32 %v200, 4294901760
    %v202 = vsub.f32 %v200, %v201
    %v203 = vand.u32 %v202, 4294901760
    %204 = vmatpush1.msra.mxu0 %v203
    %205 = vmatprep.subr.mxu0 0.0
    %v206 = vand.u32 %v50, 4294901760
    %v207 = vsub.f32 %v50, %v206
    %v208 = vand.u32 %v207, 4294901760
    %v209 = vsub.f32 %v207, %v208
    %v210 = vand.u32 %v209, 4294901760
    %211 = vmatpush1.msra.mxu0 %v210
    %212 = vmatprep.subr.mxu0 0.0
    %v213 = vand.u32 %v51, 4294901760
    %v214 = vsub.f32 %v51, %v213
    %v215 = vand.u32 %v214, 4294901760
    %v216 = vsub.f32 %v214, %v215
    %v217 = vand.u32 %v216, 4294901760
    %218 = vmatpush1.msra.mxu0 %v217
    %219 = vmatprep.subr.mxu0 0.0
    %v220 = vand.u32 %v52, 4294901760
    %v221 = vsub.f32 %v52, %v220
    %v222 = vand.u32 %v221, 4294901760
    %v223 = vsub.f32 %v221, %v222
    %v224 = vand.u32 %v223, 4294901760
    %225 = vmatpush1.msra.mxu0 %v224
    %226 = vmatprep.subr.mxu0 0.0
    %v227 = vand.u32 %v53, 4294901760
    %v228 = vsub.f32 %v53, %v227
    %v229 = vand.u32 %v228, 4294901760
    %v230 = vsub.f32 %v228, %v229
    %v231 = vand.u32 %v230, 4294901760
    %232 = vmatpush1.msra.mxu0 %v231
    %233 = vmatprep.subr.mxu0 0.0
    %v234 = vand.u32 %v54, 4294901760
    %v235 = vsub.f32 %v54, %v234
    %v236 = vand.u32 %v235, 4294901760
    %v237 = vsub.f32 %v235, %v236
    %v238 = vand.u32 %v237, 4294901760
    %239 = vmatpush1.msra.mxu0 %v238
    %240 = vmatprep.subr.mxu0 0.0
    %v241 = vand.u32 %v55, 4294901760
    %v242 = vsub.f32 %v55, %v241
    %v243 = vand.u32 %v242, 4294901760
    %v244 = vsub.f32 %v242, %v243
    %v245 = vand.u32 %v244, 4294901760
    %246 = vmatpush1.msra.mxu0 %v245
    %247 = vmatprep.subr.mxu0 0.0
    %v248 = vand.u32 %v56, 4294901760
    %v249 = vsub.f32 %v56, %v248
    %v250 = vand.u32 %v249, 4294901760
    %v251 = vsub.f32 %v249, %v250
    %v252 = vand.u32 %v251, 4294901760
    %253 = vmatpush1.msra.mxu0 %v252
    %254 = vmatprep.subr.mxu0 0.0
    %v255 = vand.u32 %v57, 4294901760
    %v256 = vsub.f32 %v57, %v255
    %v257 = vand.u32 %v256, 4294901760
    %v258 = vsub.f32 %v256, %v257
    %v259 = vand.u32 %v258, 4294901760
    %260 = vmatpush1.msra.mxu0 %v259
    %261 = vmatprep.subr.mxu0 0.0
    %262 = vmatpush1.msra.mxu0 0.0
    %263 = vmatprep.subr.mxu0 0.0
    %264 = vmatpush1.msra.mxu0 0.0
    %265 = vmatprep.subr.mxu0 0.0
    %266 = vmatpush1.msra.mxu0 0.0
    %267 = vmatprep.subr.mxu0 0.0
    %268 = vmatpush1.msra.mxu0 0.0
    %269 = vmatprep.subr.mxu0 0.0
    %270 = vmatpush1.msra.mxu0 0.0
    %271 = vmatprep.subr.mxu0 0.0
    %272 = vmatpush1.msra.mxu0 0.0
    %273 = vmatprep.subr.mxu0 0.0
    %274 = vmatpush1.msra.mxu0 0.0
    %275 = vmatprep.subr.mxu0 0.0
    %276 = vmatpush1.msra.mxu0 0.0
    %277 = vmatprep.subr.mxu0 0.0
    %278 = vmatpush1.msra.mxu0 0.0
    %279 = vmatprep.subr.mxu0 0.0
    %280 = vmatpush1.msra.mxu0 0.0
    %281 = vmatprep.subr.mxu0 0.0
    %282 = vmatpush1.msra.mxu0 0.0
    %283 = vmatprep.subr.mxu0 0.0
    %284 = vmatpush1.msra.mxu0 0.0
    %285 = vmatprep.subr.mxu0 0.0
    %286 = vmatpush1.msra.mxu0 0.0
    %287 = vmatprep.subr.mxu0 0.0
    %288 = vmatpush1.msra.mxu0 0.0
    %289 = vmatprep.subr.mxu0 0.0
    %290 = vmatpush1.msra.mxu0 0.0
    %291 = vmatprep.subr.mxu0 0.0
    %292 = vmatpush1.msra.mxu0 0.0
    %293 = vmatprep.mubr.f32.mxu0 0.0
    %v294 = vand.u32 %v41, 4294901760
    %295 = vmatmul.mubr.f32.gmra.mrb[0].mxu0 %v294
    %v296 = vpop.f32.mrb[0].mxu0
    %v297 = vadd.f32 %v146, %v296
    %v298 = vpop.f32.mrb[0].mxu0
    %299 = vdwg.mxu0
    %300 = vmatprep.subr.mxu0 0.0
    %v301 = vand.u32 %v42, 4294901760
    %v302 = vsub.f32 %v42, %v301
    %303 = vmatpush1.msra.mxu0 %v302
    %304 = vmatprep.subr.mxu0 0.0
    %v305 = vand.u32 %v43, 4294901760
    %v306 = vsub.f32 %v43, %v305
    %307 = vmatpush1.msra.mxu0 %v306
    %308 = vmatprep.subr.mxu0 0.0
    %v309 = vand.u32 %v44, 4294901760
    %v310 = vsub.f32 %v44, %v309
    %311 = vmatpush1.msra.mxu0 %v310
    %312 = vmatprep.subr.mxu0 0.0
    %v313 = vand.u32 %v45, 4294901760
    %v314 = vsub.f32 %v45, %v313
    %315 = vmatpush1.msra.mxu0 %v314
    %316 = vmatprep.subr.mxu0 0.0
    %v317 = vand.u32 %v46, 4294901760
    %v318 = vsub.f32 %v46, %v317
    %319 = vmatpush1.msra.mxu0 %v318
    %320 = vmatprep.subr.mxu0 0.0
    %v321 = vand.u32 %v47, 4294901760
    %v322 = vsub.f32 %v47, %v321
    %323 = vmatpush1.msra.mxu0 %v322
    %324 = vmatprep.subr.mxu0 0.0
    %v325 = vand.u32 %v48, 4294901760
    %v326 = vsub.f32 %v48, %v325
    %327 = vmatpush1.msra.mxu0 %v326
    %328 = vmatprep.subr.mxu0 0.0
    %v329 = vand.u32 %v49, 4294901760
    %v330 = vsub.f32 %v49, %v329
    %331 = vmatpush1.msra.mxu0 %v330
    %332 = vmatprep.subr.mxu0 0.0
    %v333 = vand.u32 %v50, 4294901760
    %v334 = vsub.f32 %v50, %v333
    %335 = vmatpush1.msra.mxu0 %v334
    %336 = vmatprep.subr.mxu0 0.0
    %v337 = vand.u32 %v51, 4294901760
    %v338 = vsub.f32 %v51, %v337
    %339 = vmatpush1.msra.mxu0 %v338
    %340 = vmatprep.subr.mxu0 0.0
    %v341 = vand.u32 %v52, 4294901760
    %v342 = vsub.f32 %v52, %v341
    %343 = vmatpush1.msra.mxu0 %v342
    %344 = vmatprep.subr.mxu0 0.0
    %v345 = vand.u32 %v53, 4294901760
    %v346 = vsub.f32 %v53, %v345
    %347 = vmatpush1.msra.mxu0 %v346
    %348 = vmatprep.subr.mxu0 0.0
    %v349 = vand.u32 %v54, 4294901760
    %v350 = vsub.f32 %v54, %v349
    %351 = vmatpush1.msra.mxu0 %v350
    %352 = vmatprep.subr.mxu0 0.0
    %v353 = vand.u32 %v55, 4294901760
    %v354 = vsub.f32 %v55, %v353
    %355 = vmatpush1.msra.mxu0 %v354
    %356 = vmatprep.subr.mxu0 0.0
    %v357 = vand.u32 %v56, 4294901760
    %v358 = vsub.f32 %v56, %v357
    %359 = vmatpush1.msra.mxu0 %v358
    %360 = vmatprep.subr.mxu0 0.0
    %v361 = vand.u32 %v57, 4294901760
    %v362 = vsub.f32 %v57, %v361
    %363 = vmatpush1.msra.mxu0 %v362
    %364 = vmatprep.subr.mxu0 0.0
    %365 = vmatpush1.msra.mxu0 0.0
    %366 = vmatprep.subr.mxu0 0.0
    %367 = vmatpush1.msra.mxu0 0.0
    %368 = vmatprep.subr.mxu0 0.0
    %369 = vmatpush1.msra.mxu0 0.0
    %370 = vmatprep.subr.mxu0 0.0
    %371 = vmatpush1.msra.mxu0 0.0
    %372 = vmatprep.subr.mxu0 0.0
    %373 = vmatpush1.msra.mxu0 0.0
    %374 = vmatprep.subr.mxu0 0.0
    %375 = vmatpush1.msra.mxu0 0.0
    %376 = vmatprep.subr.mxu0 0.0
    %377 = vmatpush1.msra.mxu0 0.0
    %378 = vmatprep.subr.mxu0 0.0
    %379 = vmatpush1.msra.mxu0 0.0
    %380 = vmatprep.subr.mxu0 0.0
    %381 = vmatpush1.msra.mxu0 0.0
    %382 = vmatprep.subr.mxu0 0.0
    %383 = vmatpush1.msra.mxu0 0.0
    %384 = vmatprep.subr.mxu0 0.0
    %385 = vmatpush1.msra.mxu0 0.0
    %386 = vmatprep.subr.mxu0 0.0
    %387 = vmatpush1.msra.mxu0 0.0
    %388 = vmatprep.subr.mxu0 0.0
    %389 = vmatpush1.msra.mxu0 0.0
    %390 = vmatprep.subr.mxu0 0.0
    %391 = vmatpush1.msra.mxu0 0.0
    %392 = vmatprep.subr.mxu0 0.0
    %393 = vmatpush1.msra.mxu0 0.0
    %394 = vmatprep.subr.mxu0 0.0
    %395 = vmatpush1.msra.mxu0 0.0
    %396 = vmatprep.mubr.f32.mxu0 0.0
    %v397 = vand.u32 %v41, 4294901760
    %v398 = vsub.f32 %v41, %v397
    %399 = vmatmul.mubr.f32.gmra.mrb[0].mxu0 %v398
    %v400 = vpop.f32.mrb[0].mxu0
    %v401 = vadd.f32 %v297, %v400
    %v402 = vpop.f32.mrb[0].mxu0
    %403 = vdwg.mxu0
    %404 = vmatprep.subr.mxu0 0.0
    %v405 = vand.u32 %v42, 4294901760
    %406 = vmatpush1.msra.mxu0 %v405
    %407 = vmatprep.subr.mxu0 0.0
    %v408 = vand.u32 %v43, 4294901760
    %409 = vmatpush1.msra.mxu0 %v408
    %410 = vmatprep.subr.mxu0 0.0
    %v411 = vand.u32 %v44, 4294901760
    %412 = vmatpush1.msra.mxu0 %v411
    %413 = vmatprep.subr.mxu0 0.0
    %v414 = vand.u32 %v45, 4294901760
    %415 = vmatpush1.msra.mxu0 %v414
    %416 = vmatprep.subr.mxu0 0.0
    %v417 = vand.u32 %v46, 4294901760
    %418 = vmatpush1.msra.mxu0 %v417
    %419 = vmatprep.subr.mxu0 0.0
    %v420 = vand.u32 %v47, 4294901760
    %421 = vmatpush1.msra.mxu0 %v420
    %422 = vmatprep.subr.mxu0 0.0
    %v423 = vand.u32 %v48, 4294901760
    %424 = vmatpush1.msra.mxu0 %v423
    %425 = vmatprep.subr.mxu0 0.0
    %v426 = vand.u32 %v49, 4294901760
    %427 = vmatpush1.msra.mxu0 %v426
    %428 = vmatprep.subr.mxu0 0.0
    %v429 = vand.u32 %v50, 4294901760
    %430 = vmatpush1.msra.mxu0 %v429
    %431 = vmatprep.subr.mxu0 0.0
    %v432 = vand.u32 %v51, 4294901760
    %433 = vmatpush1.msra.mxu0 %v432
    %434 = vmatprep.subr.mxu0 0.0
    %v435 = vand.u32 %v52, 4294901760
    %436 = vmatpush1.msra.mxu0 %v435
    %437 = vmatprep.subr.mxu0 0.0
    %v438 = vand.u32 %v53, 4294901760
    %439 = vmatpush1.msra.mxu0 %v438
    %440 = vmatprep.subr.mxu0 0.0
    %v441 = vand.u32 %v54, 4294901760
    %442 = vmatpush1.msra.mxu0 %v441
    %443 = vmatprep.subr.mxu0 0.0
    %v444 = vand.u32 %v55, 4294901760
    %445 = vmatpush1.msra.mxu0 %v444
    %446 = vmatprep.subr.mxu0 0.0
    %v447 = vand.u32 %v56, 4294901760
    %448 = vmatpush1.msra.mxu0 %v447
    %449 = vmatprep.subr.mxu0 0.0
    %v450 = vand.u32 %v57, 4294901760
    %451 = vmatpush1.msra.mxu0 %v450
    %452 = vmatprep.subr.mxu0 0.0
    %453 = vmatpush1.msra.mxu0 0.0
    %454 = vmatprep.subr.mxu0 0.0
    %455 = vmatpush1.msra.mxu0 0.0
    %456 = vmatprep.subr.mxu0 0.0
    %457 = vmatpush1.msra.mxu0 0.0
    %458 = vmatprep.subr.mxu0 0.0
    %459 = vmatpush1.msra.mxu0 0.0
    %460 = vmatprep.subr.mxu0 0.0
    %461 = vmatpush1.msra.mxu0 0.0
    %462 = vmatprep.subr.mxu0 0.0
    %463 = vmatpush1.msra.mxu0 0.0
    %464 = vmatprep.subr.mxu0 0.0
    %465 = vmatpush1.msra.mxu0 0.0
    %466 = vmatprep.subr.mxu0 0.0
    %467 = vmatpush1.msra.mxu0 0.0
    %468 = vmatprep.subr.mxu0 0.0
    %469 = vmatpush1.msra.mxu0 0.0
    %470 = vmatprep.subr.mxu0 0.0
    %471 = vmatpush1.msra.mxu0 0.0
    %472 = vmatprep.subr.mxu0 0.0
    %473 = vmatpush1.msra.mxu0 0.0
    %474 = vmatprep.subr.mxu0 0.0
    %475 = vmatpush1.msra.mxu0 0.0
    %476 = vmatprep.subr.mxu0 0.0
    %477 = vmatpush1.msra.mxu0 0.0
    %478 = vmatprep.subr.mxu0 0.0
    %479 = vmatpush1.msra.mxu0 0.0
    %480 = vmatprep.subr.mxu0 0.0
    %481 = vmatpush1.msra.mxu0 0.0
    %482 = vmatprep.subr.mxu0 0.0
    %483 = vmatpush1.msra.mxu0 0.0
    %484 = vmatprep.mubr.f32.mxu0 0.0
    %v485 = vand.u32 %v41, 4294901760
    %v486 = vsub.f32 %v41, %v485
    %v487 = vand.u32 %v486, 4294901760
    %488 = vmatmul.mubr.f32.gmra.mrb[0].mxu0 %v487
    %v489 = vpop.f32.mrb[0].mxu0
    %v490 = vadd.f32 %v401, %v489
    %v491 = vpop.f32.mrb[0].mxu0
    %492 = vdwg.mxu0
    %493 = vmatprep.subr.mxu0 0.0
    %v494 = vand.u32 %v42, 4294901760
    %v495 = vsub.f32 %v42, %v494
    %v496 = vand.u32 %v495, 4294901760
    %497 = vmatpush1.msra.mxu0 %v496
    %498 = vmatprep.subr.mxu0 0.0
    %v499 = vand.u32 %v43, 4294901760
    %v500 = vsub.f32 %v43, %v499
    %v501 = vand.u32 %v500, 4294901760
    %502 = vmatpush1.msra.mxu0 %v501
    %503 = vmatprep.subr.mxu0 0.0
    %v504 = vand.u32 %v44, 4294901760
    %v505 = vsub.f32 %v44, %v504
    %v506 = vand.u32 %v505, 4294901760
    %507 = vmatpush1.msra.mxu0 %v506
    %508 = vmatprep.subr.mxu0 0.0
    %v509 = vand.u32 %v45, 4294901760
    %v510 = vsub.f32 %v45, %v509
    %v511 = vand.u32 %v510, 4294901760
    %512 = vmatpush1.msra.mxu0 %v511
    %513 = vmatprep.subr.mxu0 0.0
    %v514 = vand.u32 %v46, 4294901760
    %v515 = vsub.f32 %v46, %v514
    %v516 = vand.u32 %v515, 4294901760
    %517 = vmatpush1.msra.mxu0 %v516
    %518 = vmatprep.subr.mxu0 0.0
    %v519 = vand.u32 %v47, 4294901760
    %v520 = vsub.f32 %v47, %v519
    %v521 = vand.u32 %v520, 4294901760
    %522 = vmatpush1.msra.mxu0 %v521
    %523 = vmatprep.subr.mxu0 0.0
    %v524 = vand.u32 %v48, 4294901760
    %v525 = vsub.f32 %v48, %v524
    %v526 = vand.u32 %v525, 4294901760
    %527 = vmatpush1.msra.mxu0 %v526
    %528 = vmatprep.subr.mxu0 0.0
    %v529 = vand.u32 %v49, 4294901760
    %v530 = vsub.f32 %v49, %v529
    %v531 = vand.u32 %v530, 4294901760
    %532 = vmatpush1.msra.mxu0 %v531
    %533 = vmatprep.subr.mxu0 0.0
    %v534 = vand.u32 %v50, 4294901760
    %v535 = vsub.f32 %v50, %v534
    %v536 = vand.u32 %v535, 4294901760
    %537 = vmatpush1.msra.mxu0 %v536
    %538 = vmatprep.subr.mxu0 0.0
    %v539 = vand.u32 %v51, 4294901760
    %v540 = vsub.f32 %v51, %v539
    %v541 = vand.u32 %v540, 4294901760
    %542 = vmatpush1.msra.mxu0 %v541
    %543 = vmatprep.subr.mxu0 0.0
    %v544 = vand.u32 %v52, 4294901760
    %v545 = vsub.f32 %v52, %v544
    %v546 = vand.u32 %v545, 4294901760
    %547 = vmatpush1.msra.mxu0 %v546
    %548 = vmatprep.subr.mxu0 0.0
    %v549 = vand.u32 %v53, 4294901760
    %v550 = vsub.f32 %v53, %v549
    %v551 = vand.u32 %v550, 4294901760
    %552 = vmatpush1.msra.mxu0 %v551
    %553 = vmatprep.subr.mxu0 0.0
    %v554 = vand.u32 %v54, 4294901760
    %v555 = vsub.f32 %v54, %v554
    %v556 = vand.u32 %v555, 4294901760
    %557 = vmatpush1.msra.mxu0 %v556
    %558 = vmatprep.subr.mxu0 0.0
    %v559 = vand.u32 %v55, 4294901760
    %v560 = vsub.f32 %v55, %v559
    %v561 = vand.u32 %v560, 4294901760
    %562 = vmatpush1.msra.mxu0 %v561
    %563 = vmatprep.subr.mxu0 0.0
    %v564 = vand.u32 %v56, 4294901760
    %v565 = vsub.f32 %v56, %v564
    %v566 = vand.u32 %v565, 4294901760
    %567 = vmatpush1.msra.mxu0 %v566
    %568 = vmatprep.subr.mxu0 0.0
    %v569 = vand.u32 %v57, 4294901760
    %v570 = vsub.f32 %v57, %v569
    %v571 = vand.u32 %v570, 4294901760
    %572 = vmatpush1.msra.mxu0 %v571
    %573 = vmatprep.subr.mxu0 0.0
    %574 = vmatpush1.msra.mxu0 0.0
    %575 = vmatprep.subr.mxu0 0.0
    %576 = vmatpush1.msra.mxu0 0.0
    %577 = vmatprep.subr.mxu0 0.0
    %578 = vmatpush1.msra.mxu0 0.0
    %579 = vmatprep.subr.mxu0 0.0
    %580 = vmatpush1.msra.mxu0 0.0
    %581 = vmatprep.subr.mxu0 0.0
    %582 = vmatpush1.msra.mxu0 0.0
    %583 = vmatprep.subr.mxu0 0.0
    %584 = vmatpush1.msra.mxu0 0.0
    %585 = vmatprep.subr.mxu0 0.0
    %586 = vmatpush1.msra.mxu0 0.0
    %587 = vmatprep.subr.mxu0 0.0
    %588 = vmatpush1.msra.mxu0 0.0
    %589 = vmatprep.subr.mxu0 0.0
    %590 = vmatpush1.msra.mxu0 0.0
    %591 = vmatprep.subr.mxu0 0.0
    %592 = vmatpush1.msra.mxu0 0.0
    %593 = vmatprep.subr.mxu0 0.0
    %594 = vmatpush1.msra.mxu0 0.0
    %595 = vmatprep.subr.mxu0 0.0
    %596 = vmatpush1.msra.mxu0 0.0
    %597 = vmatprep.subr.mxu0 0.0
    %598 = vmatpush1.msra.mxu0 0.0
    %599 = vmatprep.subr.mxu0 0.0
    %600 = vmatpush1.msra.mxu0 0.0
    %601 = vmatprep.subr.mxu0 0.0
    %602 = vmatpush1.msra.mxu0 0.0
    %603 = vmatprep.subr.mxu0 0.0
    %604 = vmatpush1.msra.mxu0 0.0
    %605 = vmatprep.mubr.f32.mxu0 0.0
    %v606 = vand.u32 %v41, 4294901760
    %607 = vmatmul.mubr.f32.gmra.mrb[0].mxu0 %v606
    %v608 = vpop.f32.mrb[0].mxu0
    %v609 = vadd.f32 %v490, %v608
    %v610 = vpop.f32.mrb[0].mxu0
    %611 = vdwg.mxu0
    %612 = vmatprep.subr.mxu0 0.0
    %v613 = vand.u32 %v42, 4294901760
    %614 = vmatpush1.msra.mxu0 %v613
    %615 = vmatprep.subr.mxu0 0.0
    %v616 = vand.u32 %v43, 4294901760
    %617 = vmatpush1.msra.mxu0 %v616
    %618 = vmatprep.subr.mxu0 0.0
    %v619 = vand.u32 %v44, 4294901760
    %620 = vmatpush1.msra.mxu0 %v619
    %621 = vmatprep.subr.mxu0 0.0
    %v622 = vand.u32 %v45, 4294901760
    %623 = vmatpush1.msra.mxu0 %v622
    %624 = vmatprep.subr.mxu0 0.0
    %v625 = vand.u32 %v46, 4294901760
    %626 = vmatpush1.msra.mxu0 %v625
    %627 = vmatprep.subr.mxu0 0.0
    %v628 = vand.u32 %v47, 4294901760
    %629 = vmatpush1.msra.mxu0 %v628
    %630 = vmatprep.subr.mxu0 0.0
    %v631 = vand.u32 %v48, 4294901760
    %632 = vmatpush1.msra.mxu0 %v631
    %633 = vmatprep.subr.mxu0 0.0
    %v634 = vand.u32 %v49, 4294901760
    %635 = vmatpush1.msra.mxu0 %v634
    %636 = vmatprep.subr.mxu0 0.0
    %v637 = vand.u32 %v50, 4294901760
    %638 = vmatpush1.msra.mxu0 %v637
    %639 = vmatprep.subr.mxu0 0.0
    %v640 = vand.u32 %v51, 4294901760
    %641 = vmatpush1.msra.mxu0 %v640
    %642 = vmatprep.subr.mxu0 0.0
    %v643 = vand.u32 %v52, 4294901760
    %644 = vmatpush1.msra.mxu0 %v643
    %645 = vmatprep.subr.mxu0 0.0
    %v646 = vand.u32 %v53, 4294901760
    %647 = vmatpush1.msra.mxu0 %v646
    %648 = vmatprep.subr.mxu0 0.0
    %v649 = vand.u32 %v54, 4294901760
    %650 = vmatpush1.msra.mxu0 %v649
    %651 = vmatprep.subr.mxu0 0.0
    %v652 = vand.u32 %v55, 4294901760
    %653 = vmatpush1.msra.mxu0 %v652
    %654 = vmatprep.subr.mxu0 0.0
    %v655 = vand.u32 %v56, 4294901760
    %656 = vmatpush1.msra.mxu0 %v655
    %657 = vmatprep.subr.mxu0 0.0
    %v658 = vand.u32 %v57, 4294901760
    %659 = vmatpush1.msra.mxu0 %v658
    %660 = vmatprep.subr.mxu0 0.0
    %661 = vmatpush1.msra.mxu0 0.0
    %662 = vmatprep.subr.mxu0 0.0
    %663 = vmatpush1.msra.mxu0 0.0
    %664 = vmatprep.subr.mxu0 0.0
    %665 = vmatpush1.msra.mxu0 0.0
    %666 = vmatprep.subr.mxu0 0.0
    %667 = vmatpush1.msra.mxu0 0.0
    %668 = vmatprep.subr.mxu0 0.0
    %669 = vmatpush1.msra.mxu0 0.0
    %670 = vmatprep.subr.mxu0 0.0
    %671 = vmatpush1.msra.mxu0 0.0
    %672 = vmatprep.subr.mxu0 0.0
    %673 = vmatpush1.msra.mxu0 0.0
    %674 = vmatprep.subr.mxu0 0.0
    %675 = vmatpush1.msra.mxu0 0.0
    %676 = vmatprep.subr.mxu0 0.0
    %677 = vmatpush1.msra.mxu0 0.0
    %678 = vmatprep.subr.mxu0 0.0
    %679 = vmatpush1.msra.mxu0 0.0
    %680 = vmatprep.subr.mxu0 0.0
    %681 = vmatpush1.msra.mxu0 0.0
    %682 = vmatprep.subr.mxu0 0.0
    %683 = vmatpush1.msra.mxu0 0.0
    %684 = vmatprep.subr.mxu0 0.0
    %685 = vmatpush1.msra.mxu0 0.0
    %686 = vmatprep.subr.mxu0 0.0
    %687 = vmatpush1.msra.mxu0 0.0
    %688 = vmatprep.subr.mxu0 0.0
    %689 = vmatpush1.msra.mxu0 0.0
    %690 = vmatprep.subr.mxu0 0.0
    %691 = vmatpush1.msra.mxu0 0.0
    %692 = vmatprep.mubr.f32.mxu0 0.0
    %v693 = vand.u32 %v41, 4294901760
    %694 = vmatmul.mubr.f32.gmra.mrb[0].mxu0 %v693
    %v695 = vpop.f32.mrb[0].mxu0
    %v696 = vadd.f32 %v609, %v695
    %v697 = vpop.f32.mrb[0].mxu0
    %698 = vdwg.mxu0
    %699 = vst [vmem:[#allocation8] sm:$0xff] %v696
    %v700 = vsub.f32 %v41, %v696
    %701 = vst [vmem:[#allocation7] sm:$0xff] %v700
    // Predicated region
    $region18: #{tpu_custom_call.1} parent=1 // pred_check
      _
    $region19: #{tpu_custom_call.1} parent=1 // pred_check_branch
      %703 = sbr.rel (0) target = $region21
    $region20: #{tpu_custom_call.1} parent=1 // pred_region
      %s705 = ssub.s32 128, 128
      %706 = vsyncadd [#allocation4], %s705
      %s708 = sshll.u32 [#allocation7], 4
      %s709 = int_to_ptr.vmem [resolvable:$true] %s708
      %711 = dma.vmem_to_hbm [thread:$0]  %s709, 128, %s2, [#allocation4]
    $region21: #{tpu_custom_call.1} parent=1 // pred_fallthru
      _
    // Predicated region
    $region22: #{tpu_custom_call.1} parent=1 // pred_check
      _
    $region23: #{tpu_custom_call.1} parent=1 // pred_check_branch
      %713 = sbr.rel (0) target = $region25
    $region24: #{tpu_custom_call.1} parent=1 // pred_region
      %s715 = ssub.s32 128, 128
      %716 = vsyncadd [#allocation9], %s715
      %s718 = sshll.u32 [#allocation8], 4
      %s719 = int_to_ptr.vmem [resolvable:$true] %s718
      %721 = dma.vmem_to_hbm [thread:$0]  %s719, 128, %s3, [#allocation9]
    $region25: #{tpu_custom_call.1} parent=1 // pred_fallthru
      _
    // Predicated region
    $region26: #{tpu_custom_call.1} parent=1 // pred_check
      _
    $region27: #{tpu_custom_call.1} parent=1 // pred_check_branch
      %723 = sbr.rel (0) target = $region29
    $region28: #{tpu_custom_call.1} parent=1 // pred_region
      %724 = dma.done [#allocation4], 128
    $region29: #{tpu_custom_call.1} parent=1 // pred_fallthru
      _
    // Predicated region
    $region30: #{tpu_custom_call.1} parent=1 // pred_check
      _
    $region31: #{tpu_custom_call.1} parent=1 // pred_check_branch
      %726 = sbr.rel (0) target = $region33
    $region32: #{tpu_custom_call.1} parent=1 // pred_region
      %727 = dma.done [#allocation9], 128
    $region33: #{tpu_custom_call.1} parent=1 // pred_fallthru
      _
    %728 = vsyncpa [#allocation3], 1
    %729 = vsyncpa [#allocation6], 1
    %730 = vsyncpa [#allocation4], 1
    %731 = vsyncpa [#allocation9], 1

</llo_original>
